<compile_context>
chip_gen: v7x
topology: tpu7x:2x2x1
jax: 0.10.0
libtpu: 0.0.40
codegen_flags: <defaults>
</compile_context>

<pallas_src>
import functools

import jax
import jax.numpy as jnp
from jax.experimental import pallas as pl
from jax.experimental.pallas import tpu as pltpu


def _force_from_edge_kernel(src_ref, dst_ref, det_ref, o_ref):
    # src_ref, dst_ref: [E_TILE, 1] int32   (padded edges carry -1)
    # det_ref:          [8, E_TILE] float32 (rows 0..2 = dE_dr^T, rows 3..7 = 0)
    # o_ref:            [8, N_TILE] float32 (resident / accumulated across E axis)
    e_tile = src_ref.shape[0]
    n_tile = o_ref.shape[1]

    @pl.when(pl.program_id(1) == 0)
    def _():
        o_ref[...] = jnp.zeros_like(o_ref)

    n_offset = pl.program_id(0) * n_tile

    # Atom ids along the lane axis (constant iota); the tile offset is folded
    # into the cheap [E_TILE, 1] operands instead of the full-tile iota.
    lane_ids = jax.lax.broadcasted_iota(jnp.int32, (e_tile, n_tile), 1)
    src_local = src_ref[...] - n_offset          # [E_TILE, 1]
    dst_local = dst_ref[...] - n_offset          # [E_TILE, 1]

    diff = ((lane_ids == src_local).astype(jnp.float32)
            - (lane_ids == dst_local).astype(jnp.float32))   # [E_TILE, N_TILE]

    # scatter_add(+src) - scatter_add(+dst) as one lane-dense MXU matmul:
    #   [8, E_TILE] @ [E_TILE, N_TILE] -> [8, N_TILE]
    o_ref[...] += jnp.dot(det_ref[...], diff,
                          preferred_element_type=jnp.float32)


@functools.partial(jax.jit, static_argnames=("tot_num", "n_tile", "e_tile"))
def force_output_from_edge(dE_dr, edge_idx, tot_num, *, n_tile=256, e_tile=512):
    """dE_dr: [E, 3] float32, edge_idx: [2, E] int32, tot_num: static int."""
    E = dE_dr.shape[0]
    n_pad = ((tot_num + n_tile - 1) // n_tile) * n_tile
    e_pad = ((E + e_tile - 1) // e_tile) * e_tile

    # dE_dr^T padded to [8, e_pad]; rows 3..7 and padded-edge columns are zero.
    de_t = jnp.zeros((8, e_pad), jnp.float32)
    de_t = de_t.at[:3, :E].set(dE_dr.astype(jnp.float32).T)

    # Edge indices as [e_pad, 1]; padded edges point at -1 -> never match.
    src = jnp.full((e_pad, 1), -1, dtype=jnp.int32)
    src = src.at[:E, 0].set(edge_idx[0].astype(jnp.int32))
    dst = jnp.full((e_pad, 1), -1, dtype=jnp.int32)
    dst = dst.at[:E, 0].set(edge_idx[1].astype(jnp.int32))

    grid = (n_pad // n_tile, e_pad // e_tile)   # (atom tiles, edge tiles)

    out = pl.pallas_call(
        _force_from_edge_kernel,
        out_shape=jax.ShapeDtypeStruct((8, n_pad), jnp.float32),
        grid_spec=pl.GridSpec(
            grid=grid,
            in_specs=[
                pl.BlockSpec((e_tile, 1), lambda n, e: (e, 0)),   # src
                pl.BlockSpec((e_tile, 1), lambda n, e: (e, 0)),   # dst
                pl.BlockSpec((8, e_tile), lambda n, e: (0, e)),   # dE_dr^T
            ],
            out_specs=pl.BlockSpec((8, n_tile), lambda n, e: (0, n)),
        ),
        compiler_params=pltpu.CompilerParams(
            dimension_semantics=("parallel", "arbitrary"),
            vmem_limit_bytes=32 * 1024 * 1024,
        ),
    )(src, dst, de_t)

    # Back to the module's [N, 3] layout (drops zero padding rows/columns).
    return out[:3, :tot_num].T


def synthetic_energy(edge_vec, w):
    # Deterministic stand-in for the upstream model that produced SCALED_ENERGY.
    # energy = sum over edges of sum_k w_k * edge_vec_k^2
    return jnp.sum(edge_vec * edge_vec * w[None, :])


if __name__ == "__main__":
    key = jax.random.PRNGKey(0)
    k1, k2, k3 = jax.random.split(key, 3)

    N_ATOMS = 16          # tot_num = sum(data[NUM_ATOMS])
    N_EDGES = 64

    edge_vec = jax.random.normal(k1, (N_EDGES, 3), dtype=jnp.float32)
    edge_idx = jnp.stack([
        jax.random.randint(k2, (N_EDGES,), 0, N_ATOMS, dtype=jnp.int32),
        jax.random.randint(k3, (N_EDGES,), 0, N_ATOMS, dtype=jnp.int32),
    ], axis=0)                                           # [2, E]

    # deterministic "parameters" for the synthetic energy
    w = jnp.array([0.5, -1.25, 2.0], dtype=jnp.float32)

    # torch.autograd.grad(energy, edge_vec)  ==  jax.grad of the energy fn
    dE_dr = jax.grad(lambda ev: synthetic_energy(ev, w))(edge_vec)   # [E, 3]

    force = force_output_from_edge(dE_dr, edge_idx, N_ATOMS)
    force = jax.block_until_ready(force)

    # reference: plain-JAX scatter-add difference (exact f32)
    ref = (jnp.zeros((N_ATOMS, 3), jnp.float32).at[edge_idx[0]].add(dE_dr)
           - jnp.zeros((N_ATOMS, 3), jnp.float32).at[edge_idx[1]].add(dE_dr))
    assert jnp.allclose(force, ref, atol=1e-5, rtol=1e-5)

    print("KERNEL_OK")
</pallas_src>

<mosaic_0001>
module attributes {stable_mosaic.version = 11 : i64} {
  func.func @_force_from_edge_kernel(%arg0: i32, %arg1: i32, %arg2: memref<512x1xi32, #tpu.memory_space<vmem>>, %arg3: memref<512x1xi32, #tpu.memory_space<vmem>>, %arg4: memref<8x512xf32, #tpu.memory_space<vmem>>, %arg5: memref<8x256xf32, #tpu.memory_space<vmem>>) attributes {dimension_semantics = [#tpu.dimension_semantics<parallel>, #tpu.dimension_semantics<arbitrary>], iteration_bounds = array<i64: 1, 1>, scalar_prefetch = 0 : i64, scratch_operands = 0 : i64, tpu.core_type = #tpu.core_type<tc>, window_params = [{transform_indices = @transform_0, window_bounds = array<i64: 512, 1>}, {transform_indices = @transform_1, window_bounds = array<i64: 512, 1>}, {transform_indices = @transform_2, window_bounds = array<i64: 8, 512>}, {transform_indices = @transform_3, window_bounds = array<i64: 8, 256>}]} {
    %c0_i32 = arith.constant 0 : i32
    %0 = arith.cmpi eq, %arg1, %c0_i32 : i32
    %1 = arith.extui %0 : i1 to i32
    %c0_i32_0 = arith.constant 0 : i32
    %2 = arith.cmpi ne, %1, %c0_i32_0 : i32
    scf.if %2 {
      %cst_10 = arith.constant 0.000000e+00 : f32
      %25 = vector.broadcast %cst_10 : f32 to vector<8x256xf32>
      %c0_11 = arith.constant 0 : index
      %c0_12 = arith.constant 0 : index
      %26 = vector.load %arg5[%c0_11, %c0_12] : memref<8x256xf32, #tpu.memory_space<vmem>>, vector<8x256xf32>
      tpu.vector_store %arg5[%c0_11, %c0_12], %25 {strides = array<i32>} : memref<8x256xf32, #tpu.memory_space<vmem>>, vector<8x256xf32>,
    } else {
    }
    %c256_i32 = arith.constant 256 : i32
    %3 = arith.muli %arg0, %c256_i32 : i32
    %4 = tpu.iota {dimensions = array<i32: 1>} : vector<512x256xi32>
    %c0 = arith.constant 0 : index
    %c0_1 = arith.constant 0 : index
    %5 = vector.load %arg2[%c0, %c0_1] : memref<512x1xi32, #tpu.memory_space<vmem>>, vector<512x1xi32>
    %6 = vector.broadcast %3 : i32 to vector<512x1xi32>
    %7 = arith.subi %5, %6 : vector<512x1xi32>
    %c0_2 = arith.constant 0 : index
    %c0_3 = arith.constant 0 : index
    %8 = vector.load %arg3[%c0_2, %c0_3] : memref<512x1xi32, #tpu.memory_space<vmem>>, vector<512x1xi32>
    %9 = vector.broadcast %3 : i32 to vector<512x1xi32>
    %10 = arith.subi %8, %9 : vector<512x1xi32>
    %11 = vector.broadcast %7 : vector<512x1xi32> to vector<512x256xi32>
    %12 = arith.cmpi eq, %4, %11 : vector<512x256xi32>
    %13 = arith.extui %12 : vector<512x256xi1> to vector<512x256xi32>
    %14 = arith.sitofp %13 : vector<512x256xi32> to vector<512x256xf32>
    %15 = vector.broadcast %10 : vector<512x1xi32> to vector<512x256xi32>
    %16 = arith.cmpi eq, %4, %15 : vector<512x256xi32>
    %17 = arith.extui %16 : vector<512x256xi1> to vector<512x256xi32>
    %18 = arith.sitofp %17 : vector<512x256xi32> to vector<512x256xf32>
    %19 = arith.subf %14, %18 : vector<512x256xf32>
    %c0_4 = arith.constant 0 : index
    %c0_5 = arith.constant 0 : index
    %20 = vector.load %arg5[%c0_4, %c0_5] : memref<8x256xf32, #tpu.memory_space<vmem>>, vector<8x256xf32>
    %c0_6 = arith.constant 0 : index
    %c0_7 = arith.constant 0 : index
    %21 = vector.load %arg4[%c0_6, %c0_7] : memref<8x512xf32, #tpu.memory_space<vmem>>, vector<8x512xf32>
    %cst = arith.constant dense<0.000000e+00> : vector<8x256xf32>
    %22 = tpu.matmul %21, %19, %cst {dimension_numbers = #tpu.dot_dimension_numbers<[1], [0], [0], [1], [0, 0, 1, 1], [], []>} : vector<8x512xf32>, vector<512x256xf32>, vector<8x256xf32> -> vector<8x256xf32>
    %23 = arith.addf %20, %22 : vector<8x256xf32>
    %c0_8 = arith.constant 0 : index
    %c0_9 = arith.constant 0 : index
    %24 = vector.load %arg5[%c0_8, %c0_9] : memref<8x256xf32, #tpu.memory_space<vmem>>, vector<8x256xf32>
    tpu.vector_store %arg5[%c0_8, %c0_9], %23 {strides = array<i32>} : memref<8x256xf32, #tpu.memory_space<vmem>>, vector<8x256xf32>,
    return
  }
  func.func @transform_0(%arg0: i32, %arg1: i32) -> (i32, i32) {
    %c0_i32 = arith.constant 0 : i32
    %c0_i32_0 = arith.constant 0 : i32
    return %arg1, %c0_i32 : i32, i32
  }
  func.func @transform_1(%arg0: i32, %arg1: i32) -> (i32, i32) {
    %c0_i32 = arith.constant 0 : i32
    %c0_i32_0 = arith.constant 0 : i32
    return %arg1, %c0_i32 : i32, i32
  }
  func.func @transform_2(%arg0: i32, %arg1: i32) -> (i32, i32) {
    %c0_i32 = arith.constant 0 : i32
    %c0_i32_0 = arith.constant 0 : i32
    return %c0_i32, %arg1 : i32, i32
  }
  func.func @transform_3(%arg0: i32, %arg1: i32) -> (i32, i32) {
    %c0_i32 = arith.constant 0 : i32
    %c0_i32_0 = arith.constant 0 : i32
    return %c0_i32, %arg0 : i32, i32
  }
}

</mosaic_0001>

<llo_original>
// kernel: force_output_from_edge.1
$region0: #{force_output_from_edge.1}
  #allocation0 [shape = 'u32[]', space=smem, size = 0x4, offset = 0x4, fixed_abs, tag = 'smem constant byte address 0x4 - core index']
  #allocation1 [shape = 'u32[144,128]{1,0:T(1,128)}', space=vmem, size = 0x12000, scoped, tag = 'internal scratch']
  %s0 = inlined_call_operand.vmem [shape: s32[512,1], index: 0, kind: input, shape index: {}]
  %s1 = inlined_call_operand.vmem [shape: s32[512,1], index: 1, kind: input, shape index: {}]
  %s2 = inlined_call_operand.vmem [shape: f32[8,512], index: 2, kind: input, shape index: {}]
  %s3 = inlined_call_operand.vmem [shape: f32[8,256], index: 3, kind: output, shape index: {}]
  %s4 = sld [smem:[#allocation0]]
  $region26: #{force_output_from_edge.1} parent=0
    _
  %s6 = ssub.s32 1, %s4
  %s7 = scalar_select 0, %s6, %s4
  // Predicated region
  $region2: #{force_output_from_edge.1} parent=0 // pred_check
    _
  $region3: #{force_output_from_edge.1} parent=0 // pred_check_branch
    %9 = sbr.rel (0) target = $region5
  $region4: #{force_output_from_edge.1} parent=0 // pred_region
    _
  $region5: #{force_output_from_edge.1} parent=0 // pred_fallthru
    _
  // Predicated region
  $region6: #{force_output_from_edge.1} parent=0 // pred_check
    _
  $region7: #{force_output_from_edge.1} parent=0 // pred_check_branch
    %11 = sbr.rel (0) target = $region9
  $region8: #{force_output_from_edge.1} parent=0 // pred_region
    _
  $region9: #{force_output_from_edge.1} parent=0 // pred_fallthru
    _
  // Predicated region
  $region10: #{force_output_from_edge.1} parent=0 // pred_check
    _
  $region11: #{force_output_from_edge.1} parent=0 // pred_check_branch
    %13 = sbr.rel (0) target = $region13
  $region12: #{force_output_from_edge.1} parent=0 // pred_region
    _
  $region13: #{force_output_from_edge.1} parent=0 // pred_fallthru
    _
  %p14 = scmp.eq.s32.totalorder 0, 0
  // Predicated region
  $region14: #{force_output_from_edge.1} parent=0 // pred_check
    %p15 = pneg %p14
  $region15: #{force_output_from_edge.1} parent=0 // pred_check_branch
    %17 = sbr.rel (%p15) target = $region17
  $region16: #{force_output_from_edge.1} parent=0 // pred_region
    %18 = vst [vmem:[%s3] sm:$0xff] 0.0
    %19 = vst [vmem:[%s3 + $0x8] sm:$0xff] 0.0
  $region17: #{force_output_from_edge.1} parent=0 // pred_fallthru
    _
  %s20 = smul.u32 0, 256
  %v21 = vlaneseq
  %v22 = vand.u32 %v21, 127
  %v23 = vadd.s32 %v22, 128
  %v24 = vld [vmem:[%s0] sm:$0xff]
  %v25 = vld [vmem:[%s0 + $0x8] sm:$0xff]
  %v26 = vld [vmem:[%s0 + $0x10] sm:$0xff]
  %v27 = vld [vmem:[%s0 + $0x18] sm:$0xff]
  %v28 = vld [vmem:[%s0 + $0x20] sm:$0xff]
  %v29 = vld [vmem:[%s0 + $0x28] sm:$0xff]
  %v30 = vld [vmem:[%s0 + $0x30] sm:$0xff]
  %v31 = vld [vmem:[%s0 + $0x38] sm:$0xff]
  %v32 = vld [vmem:[%s0 + $0x40] sm:$0xff]
  %v33 = vld [vmem:[%s0 + $0x48] sm:$0xff]
  %v34 = vld [vmem:[%s0 + $0x50] sm:$0xff]
  %v35 = vld [vmem:[%s0 + $0x58] sm:$0xff]
  %v36 = vld [vmem:[%s0 + $0x60] sm:$0xff]
  %v37 = vld [vmem:[%s0 + $0x68] sm:$0xff]
  %v38 = vld [vmem:[%s0 + $0x70] sm:$0xff]
  %v39 = vld [vmem:[%s0 + $0x78] sm:$0xff]
  %v40 = vld [vmem:[%s0 + $0x80] sm:$0xff]
  %v41 = vld [vmem:[%s0 + $0x88] sm:$0xff]
  %v42 = vld [vmem:[%s0 + $0x90] sm:$0xff]
  %v43 = vld [vmem:[%s0 + $0x98] sm:$0xff]
  %v44 = vld [vmem:[%s0 + $0xa0] sm:$0xff]
  %v45 = vld [vmem:[%s0 + $0xa8] sm:$0xff]
  %v46 = vld [vmem:[%s0 + $0xb0] sm:$0xff]
  %v47 = vld [vmem:[%s0 + $0xb8] sm:$0xff]
  %v48 = vld [vmem:[%s0 + $0xc0] sm:$0xff]
  %v49 = vld [vmem:[%s0 + $0xc8] sm:$0xff]
  %v50 = vld [vmem:[%s0 + $0xd0] sm:$0xff]
  %v51 = vld [vmem:[%s0 + $0xd8] sm:$0xff]
  %v52 = vld [vmem:[%s0 + $0xe0] sm:$0xff]
  %v53 = vld [vmem:[%s0 + $0xe8] sm:$0xff]
  %v54 = vld [vmem:[%s0 + $0xf0] sm:$0xff]
  %v55 = vld [vmem:[%s0 + $0xf8] sm:$0xff]
  %v56 = vld [vmem:[%s0 + $0x100] sm:$0xff]
  %v57 = vld [vmem:[%s0 + $0x108] sm:$0xff]
  %v58 = vld [vmem:[%s0 + $0x110] sm:$0xff]
  %v59 = vld [vmem:[%s0 + $0x118] sm:$0xff]
  %v60 = vld [vmem:[%s0 + $0x120] sm:$0xff]
  %v61 = vld [vmem:[%s0 + $0x128] sm:$0xff]
  %v62 = vld [vmem:[%s0 + $0x130] sm:$0xff]
  %v63 = vld [vmem:[%s0 + $0x138] sm:$0xff]
  %v64 = vld [vmem:[%s0 + $0x140] sm:$0xff]
  %v65 = vld [vmem:[%s0 + $0x148] sm:$0xff]
  %v66 = vld [vmem:[%s0 + $0x150] sm:$0xff]
  %v67 = vld [vmem:[%s0 + $0x158] sm:$0xff]
  %v68 = vld [vmem:[%s0 + $0x160] sm:$0xff]
  %v69 = vld [vmem:[%s0 + $0x168] sm:$0xff]
  %v70 = vld [vmem:[%s0 + $0x170] sm:$0xff]
  %v71 = vld [vmem:[%s0 + $0x178] sm:$0xff]
  %v72 = vld [vmem:[%s0 + $0x180] sm:$0xff]
  %v73 = vld [vmem:[%s0 + $0x188] sm:$0xff]
  %v74 = vld [vmem:[%s0 + $0x190] sm:$0xff]
  %v75 = vld [vmem:[%s0 + $0x198] sm:$0xff]
  %v76 = vld [vmem:[%s0 + $0x1a0] sm:$0xff]
  %v77 = vld [vmem:[%s0 + $0x1a8] sm:$0xff]
  %v78 = vld [vmem:[%s0 + $0x1b0] sm:$0xff]
  %v79 = vld [vmem:[%s0 + $0x1b8] sm:$0xff]
  %v80 = vld [vmem:[%s0 + $0x1c0] sm:$0xff]
  %v81 = vld [vmem:[%s0 + $0x1c8] sm:$0xff]
  %v82 = vld [vmem:[%s0 + $0x1d0] sm:$0xff]
  %v83 = vld [vmem:[%s0 + $0x1d8] sm:$0xff]
  %v84 = vld [vmem:[%s0 + $0x1e0] sm:$0xff]
  %v85 = vld [vmem:[%s0 + $0x1e8] sm:$0xff]
  %v86 = vld [vmem:[%s0 + $0x1f0] sm:$0xff]
  %v87 = vld [vmem:[%s0 + $0x1f8] sm:$0xff]
  %v88 = vstv %s20
  %v89 = vsub.s32 %v24, %v88
  %v90 = vsub.s32 %v25, %v88
  %v91 = vsub.s32 %v26, %v88
  %v92 = vsub.s32 %v27, %v88
  %v93 = vsub.s32 %v28, %v88
  %v94 = vsub.s32 %v29, %v88
  %v95 = vsub.s32 %v30, %v88
  %v96 = vsub.s32 %v31, %v88
  %v97 = vsub.s32 %v32, %v88
  %v98 = vsub.s32 %v33, %v88
  %v99 = vsub.s32 %v34, %v88
  %v100 = vsub.s32 %v35, %v88
  %v101 = vsub.s32 %v36, %v88
  %v102 = vsub.s32 %v37, %v88
  %v103 = vsub.s32 %v38, %v88
  %v104 = vsub.s32 %v39, %v88
  %v105 = vsub.s32 %v40, %v88
  %v106 = vsub.s32 %v41, %v88
  %v107 = vsub.s32 %v42, %v88
  %v108 = vsub.s32 %v43, %v88
  %v109 = vsub.s32 %v44, %v88
  %v110 = vsub.s32 %v45, %v88
  %v111 = vsub.s32 %v46, %v88
  %v112 = vsub.s32 %v47, %v88
  %v113 = vsub.s32 %v48, %v88
  %v114 = vsub.s32 %v49, %v88
  %v115 = vsub.s32 %v50, %v88
  %v116 = vsub.s32 %v51, %v88
  %v117 = vsub.s32 %v52, %v88
  %v118 = vsub.s32 %v53, %v88
  %v119 = vsub.s32 %v54, %v88
  %v120 = vsub.s32 %v55, %v88
  %v121 = vsub.s32 %v56, %v88
  %v122 = vsub.s32 %v57, %v88
  %v123 = vsub.s32 %v58, %v88
  %v124 = vsub.s32 %v59, %v88
  %v125 = vsub.s32 %v60, %v88
  %v126 = vsub.s32 %v61, %v88
  %v127 = vsub.s32 %v62, %v88
  %v128 = vsub.s32 %v63, %v88
  %v129 = vsub.s32 %v64, %v88
  %v130 = vsub.s32 %v65, %v88
  %v131 = vsub.s32 %v66, %v88
  %v132 = vsub.s32 %v67, %v88
  %v133 = vsub.s32 %v68, %v88
  %v134 = vsub.s32 %v69, %v88
  %v135 = vsub.s32 %v70, %v88
  %v136 = vsub.s32 %v71, %v88
  %v137 = vsub.s32 %v72, %v88
  %v138 = vsub.s32 %v73, %v88
  %v139 = vsub.s32 %v74, %v88
  %v140 = vsub.s32 %v75, %v88
  %v141 = vsub.s32 %v76, %v88
  %v142 = vsub.s32 %v77, %v88
  %v143 = vsub.s32 %v78, %v88
  %v144 = vsub.s32 %v79, %v88
  %v145 = vsub.s32 %v80, %v88
  %v146 = vsub.s32 %v81, %v88
  %v147 = vsub.s32 %v82, %v88
  %v148 = vsub.s32 %v83, %v88
  %v149 = vsub.s32 %v84, %v88
  %v150 = vsub.s32 %v85, %v88
  %v151 = vsub.s32 %v86, %v88
  %v152 = vsub.s32 %v87, %v88
  %v153 = vld [vmem:[%s1] sm:$0xff]
  %v154 = vld [vmem:[%s1 + $0x8] sm:$0xff]
  %v155 = vld [vmem:[%s1 + $0x10] sm:$0xff]
  %v156 = vld [vmem:[%s1 + $0x18] sm:$0xff]
  %v157 = vld [vmem:[%s1 + $0x20] sm:$0xff]
  %v158 = vld [vmem:[%s1 + $0x28] sm:$0xff]
  %v159 = vld [vmem:[%s1 + $0x30] sm:$0xff]
  %v160 = vld [vmem:[%s1 + $0x38] sm:$0xff]
  %v161 = vld [vmem:[%s1 + $0x40] sm:$0xff]
  %v162 = vld [vmem:[%s1 + $0x48] sm:$0xff]
  %v163 = vld [vmem:[%s1 + $0x50] sm:$0xff]
  %v164 = vld [vmem:[%s1 + $0x58] sm:$0xff]
  %v165 = vld [vmem:[%s1 + $0x60] sm:$0xff]
  %v166 = vld [vmem:[%s1 + $0x68] sm:$0xff]
  %v167 = vld [vmem:[%s1 + $0x70] sm:$0xff]
  %v168 = vld [vmem:[%s1 + $0x78] sm:$0xff]
  %v169 = vld [vmem:[%s1 + $0x80] sm:$0xff]
  %v170 = vld [vmem:[%s1 + $0x88] sm:$0xff]
  %v171 = vld [vmem:[%s1 + $0x90] sm:$0xff]
  %v172 = vld [vmem:[%s1 + $0x98] sm:$0xff]
  %v173 = vld [vmem:[%s1 + $0xa0] sm:$0xff]
  %v174 = vld [vmem:[%s1 + $0xa8] sm:$0xff]
  %v175 = vld [vmem:[%s1 + $0xb0] sm:$0xff]
  %v176 = vld [vmem:[%s1 + $0xb8] sm:$0xff]
  %v177 = vld [vmem:[%s1 + $0xc0] sm:$0xff]
  %v178 = vld [vmem:[%s1 + $0xc8] sm:$0xff]
  %v179 = vld [vmem:[%s1 + $0xd0] sm:$0xff]
  %v180 = vld [vmem:[%s1 + $0xd8] sm:$0xff]
  %v181 = vld [vmem:[%s1 + $0xe0] sm:$0xff]
  %v182 = vld [vmem:[%s1 + $0xe8] sm:$0xff]
  %v183 = vld [vmem:[%s1 + $0xf0] sm:$0xff]
  %v184 = vld [vmem:[%s1 + $0xf8] sm:$0xff]
  %v185 = vld [vmem:[%s1 + $0x100] sm:$0xff]
  %v186 = vld [vmem:[%s1 + $0x108] sm:$0xff]
  %v187 = vld [vmem:[%s1 + $0x110] sm:$0xff]
  %v188 = vld [vmem:[%s1 + $0x118] sm:$0xff]
  %v189 = vld [vmem:[%s1 + $0x120] sm:$0xff]
  %v190 = vld [vmem:[%s1 + $0x128] sm:$0xff]
  %v191 = vld [vmem:[%s1 + $0x130] sm:$0xff]
  %v192 = vld [vmem:[%s1 + $0x138] sm:$0xff]
  %v193 = vld [vmem:[%s1 + $0x140] sm:$0xff]
  %v194 = vld [vmem:[%s1 + $0x148] sm:$0xff]
  %v195 = vld [vmem:[%s1 + $0x150] sm:$0xff]
  %v196 = vld [vmem:[%s1 + $0x158] sm:$0xff]
  %v197 = vld [vmem:[%s1 + $0x160] sm:$0xff]
  %v198 = vld [vmem:[%s1 + $0x168] sm:$0xff]
  %v199 = vld [vmem:[%s1 + $0x170] sm:$0xff]
  %v200 = vld [vmem:[%s1 + $0x178] sm:$0xff]
  %v201 = vld [vmem:[%s1 + $0x180] sm:$0xff]
  %v202 = vld [vmem:[%s1 + $0x188] sm:$0xff]
  %v203 = vld [vmem:[%s1 + $0x190] sm:$0xff]
  %v204 = vld [vmem:[%s1 + $0x198] sm:$0xff]
  %v205 = vld [vmem:[%s1 + $0x1a0] sm:$0xff]
  %v206 = vld [vmem:[%s1 + $0x1a8] sm:$0xff]
  %v207 = vld [vmem:[%s1 + $0x1b0] sm:$0xff]
  %v208 = vld [vmem:[%s1 + $0x1b8] sm:$0xff]
  %v209 = vld [vmem:[%s1 + $0x1c0] sm:$0xff]
  %v210 = vld [vmem:[%s1 + $0x1c8] sm:$0xff]
  %v211 = vld [vmem:[%s1 + $0x1d0] sm:$0xff]
  %v212 = vld [vmem:[%s1 + $0x1d8] sm:$0xff]
  %v213 = vld [vmem:[%s1 + $0x1e0] sm:$0xff]
  %v214 = vld [vmem:[%s1 + $0x1e8] sm:$0xff]
  %v215 = vld [vmem:[%s1 + $0x1f0] sm:$0xff]
  %v216 = vld [vmem:[%s1 + $0x1f8] sm:$0xff]
  %v217 = vsub.s32 %v153, %v88
  %v218 = vsub.s32 %v154, %v88
  %v219 = vsub.s32 %v155, %v88
  %v220 = vsub.s32 %v156, %v88
  %v221 = vsub.s32 %v157, %v88
  %v222 = vsub.s32 %v158, %v88
  %v223 = vsub.s32 %v159, %v88
  %v224 = vsub.s32 %v160, %v88
  %v225 = vsub.s32 %v161, %v88
  %v226 = vsub.s32 %v162, %v88
  %v227 = vsub.s32 %v163, %v88
  %v228 = vsub.s32 %v164, %v88
  %v229 = vsub.s32 %v165, %v88
  %v230 = vsub.s32 %v166, %v88
  %v231 = vsub.s32 %v167, %v88
  %v232 = vsub.s32 %v168, %v88
  %v233 = vsub.s32 %v169, %v88
  %v234 = vsub.s32 %v170, %v88
  %v235 = vsub.s32 %v171, %v88
  %v236 = vsub.s32 %v172, %v88
  %v237 = vsub.s32 %v173, %v88
  %v238 = vsub.s32 %v174, %v88
  %v239 = vsub.s32 %v175, %v88
  %v240 = vsub.s32 %v176, %v88
  %v241 = vsub.s32 %v177, %v88
  %v242 = vsub.s32 %v178, %v88
  %v243 = vsub.s32 %v179, %v88
  %v244 = vsub.s32 %v180, %v88
  %v245 = vsub.s32 %v181, %v88
  %v246 = vsub.s32 %v182, %v88
  %v247 = vsub.s32 %v183, %v88
  %v248 = vsub.s32 %v184, %v88
  %v249 = vsub.s32 %v185, %v88
  %v250 = vsub.s32 %v186, %v88
  %v251 = vsub.s32 %v187, %v88
  %v252 = vsub.s32 %v188, %v88
  %v253 = vsub.s32 %v189, %v88
  %v254 = vsub.s32 %v190, %v88
  %v255 = vsub.s32 %v191, %v88
  %v256 = vsub.s32 %v192, %v88
  %v257 = vsub.s32 %v193, %v88
  %v258 = vsub.s32 %v194, %v88
  %v259 = vsub.s32 %v195, %v88
  %v260 = vsub.s32 %v196, %v88
  %v261 = vsub.s32 %v197, %v88
  %v262 = vsub.s32 %v198, %v88
  %v263 = vsub.s32 %v199, %v88
  %v264 = vsub.s32 %v200, %v88
  %v265 = vsub.s32 %v201, %v88
  %v266 = vsub.s32 %v202, %v88
  %v267 = vsub.s32 %v203, %v88
  %v268 = vsub.s32 %v204, %v88
  %v269 = vsub.s32 %v205, %v88
  %v270 = vsub.s32 %v206, %v88
  %v271 = vsub.s32 %v207, %v88
  %v272 = vsub.s32 %v208, %v88
  %v273 = vsub.s32 %v209, %v88
  %v274 = vsub.s32 %v210, %v88
  %v275 = vsub.s32 %v211, %v88
  %v276 = vsub.s32 %v212, %v88
  %v277 = vsub.s32 %v213, %v88
  %v278 = vsub.s32 %v214, %v88
  %v279 = vsub.s32 %v215, %v88
  %v280 = vsub.s32 %v216, %v88
  %281 = vset.pattern.permute.xlu0 0
  %282 = vperm.xlu0 %281, %v89
  %v283 = vpop.permute.xlu0 %282
  %284 = vset.pattern.permute.xlu0 0
  %285 = vperm.xlu0 %284, %v90
  %v286 = vpop.permute.xlu0 %285
  %287 = vset.pattern.permute.xlu0 0
  %288 = vperm.xlu0 %287, %v91
  %v289 = vpop.permute.xlu0 %288
  %290 = vset.pattern.permute.xlu0 0
  %291 = vperm.xlu0 %290, %v92
  %v292 = vpop.permute.xlu0 %291
  %293 = vset.pattern.permute.xlu0 0
  %294 = vperm.xlu0 %293, %v93
  %v295 = vpop.permute.xlu0 %294
  %296 = vset.pattern.permute.xlu0 0
  %297 = vperm.xlu0 %296, %v94
  %v298 = vpop.permute.xlu0 %297
  %299 = vset.pattern.permute.xlu0 0
  %300 = vperm.xlu0 %299, %v95
  %v301 = vpop.permute.xlu0 %300
  %302 = vset.pattern.permute.xlu0 0
  %303 = vperm.xlu0 %302, %v96
  %v304 = vpop.permute.xlu0 %303
  %305 = vset.pattern.permute.xlu0 0
  %306 = vperm.xlu0 %305, %v97
  %v307 = vpop.permute.xlu0 %306
  %308 = vset.pattern.permute.xlu0 0
  %309 = vperm.xlu0 %308, %v98
  %v310 = vpop.permute.xlu0 %309
  %311 = vset.pattern.permute.xlu0 0
  %312 = vperm.xlu0 %311, %v99
  %v313 = vpop.permute.xlu0 %312
  %314 = vset.pattern.permute.xlu0 0
  %315 = vperm.xlu0 %314, %v100
  %v316 = vpop.permute.xlu0 %315
  %317 = vset.pattern.permute.xlu0 0
  %318 = vperm.xlu0 %317, %v101
  %v319 = vpop.permute.xlu0 %318
  %320 = vset.pattern.permute.xlu0 0
  %321 = vperm.xlu0 %320, %v102
  %v322 = vpop.permute.xlu0 %321
  %323 = vset.pattern.permute.xlu0 0
  %324 = vperm.xlu0 %323, %v103
  %v325 = vpop.permute.xlu0 %324
  %326 = vset.pattern.permute.xlu0 0
  %327 = vperm.xlu0 %326, %v104
  %v328 = vpop.permute.xlu0 %327
  %329 = vset.pattern.permute.xlu0 0
  %330 = vperm.xlu0 %329, %v105
  %v331 = vpop.permute.xlu0 %330
  %332 = vset.pattern.permute.xlu0 0
  %333 = vperm.xlu0 %332, %v106
  %v334 = vpop.permute.xlu0 %333
  %335 = vset.pattern.permute.xlu0 0
  %336 = vperm.xlu0 %335, %v107
  %v337 = vpop.permute.xlu0 %336
  %338 = vset.pattern.permute.xlu0 0
  %339 = vperm.xlu0 %338, %v108
  %v340 = vpop.permute.xlu0 %339
  %341 = vset.pattern.permute.xlu0 0
  %342 = vperm.xlu0 %341, %v109
  %v343 = vpop.permute.xlu0 %342
  %344 = vset.pattern.permute.xlu0 0
  %345 = vperm.xlu0 %344, %v110
  %v346 = vpop.permute.xlu0 %345
  %347 = vset.pattern.permute.xlu0 0
  %348 = vperm.xlu0 %347, %v111
  %v349 = vpop.permute.xlu0 %348
  %350 = vset.pattern.permute.xlu0 0
  %351 = vperm.xlu0 %350, %v112
  %v352 = vpop.permute.xlu0 %351
  %353 = vset.pattern.permute.xlu0 0
  %354 = vperm.xlu0 %353, %v113
  %v355 = vpop.permute.xlu0 %354
  %356 = vset.pattern.permute.xlu0 0
  %357 = vperm.xlu0 %356, %v114
  %v358 = vpop.permute.xlu0 %357
  %359 = vset.pattern.permute.xlu0 0
  %360 = vperm.xlu0 %359, %v115
  %v361 = vpop.permute.xlu0 %360
  %362 = vset.pattern.permute.xlu0 0
  %363 = vperm.xlu0 %362, %v116
  %v364 = vpop.permute.xlu0 %363
  %365 = vset.pattern.permute.xlu0 0
  %366 = vperm.xlu0 %365, %v117
  %v367 = vpop.permute.xlu0 %366
  %368 = vset.pattern.permute.xlu0 0
  %369 = vperm.xlu0 %368, %v118
  %v370 = vpop.permute.xlu0 %369
  %371 = vset.pattern.permute.xlu0 0
  %372 = vperm.xlu0 %371, %v119
  %v373 = vpop.permute.xlu0 %372
  %374 = vset.pattern.permute.xlu0 0
  %375 = vperm.xlu0 %374, %v120
  %v376 = vpop.permute.xlu0 %375
  %377 = vset.pattern.permute.xlu0 0
  %378 = vperm.xlu0 %377, %v121
  %v379 = vpop.permute.xlu0 %378
  %380 = vset.pattern.permute.xlu0 0
  %381 = vperm.xlu0 %380, %v122
  %v382 = vpop.permute.xlu0 %381
  %383 = vset.pattern.permute.xlu0 0
  %384 = vperm.xlu0 %383, %v123
  %v385 = vpop.permute.xlu0 %384
  %386 = vset.pattern.permute.xlu0 0
  %387 = vperm.xlu0 %386, %v124
  %v388 = vpop.permute.xlu0 %387
  %389 = vset.pattern.permute.xlu0 0
  %390 = vperm.xlu0 %389, %v125
  %v391 = vpop.permute.xlu0 %390
  %392 = vset.pattern.permute.xlu0 0
  %393 = vperm.xlu0 %392, %v126
  %v394 = vpop.permute.xlu0 %393
  %395 = vset.pattern.permute.xlu0 0
  %396 = vperm.xlu0 %395, %v127
  %v397 = vpop.permute.xlu0 %396
  %398 = vset.pattern.permute.xlu0 0
  %399 = vperm.xlu0 %398, %v128
  %v400 = vpop.permute.xlu0 %399
  %401 = vset.pattern.permute.xlu0 0
  %402 = vperm.xlu0 %401, %v129
  %v403 = vpop.permute.xlu0 %402
  %404 = vset.pattern.permute.xlu0 0
  %405 = vperm.xlu0 %404, %v130
  %v406 = vpop.permute.xlu0 %405
  %407 = vset.pattern.permute.xlu0 0
  %408 = vperm.xlu0 %407, %v131
  %v409 = vpop.permute.xlu0 %408
  %410 = vset.pattern.permute.xlu0 0
  %411 = vperm.xlu0 %410, %v132
  %v412 = vpop.permute.xlu0 %411
  %413 = vset.pattern.permute.xlu0 0
  %414 = vperm.xlu0 %413, %v133
  %v415 = vpop.permute.xlu0 %414
  %416 = vset.pattern.permute.xlu0 0
  %417 = vperm.xlu0 %416, %v134
  %v418 = vpop.permute.xlu0 %417
  %419 = vset.pattern.permute.xlu0 0
  %420 = vperm.xlu0 %419, %v135
  %v421 = vpop.permute.xlu0 %420
  %422 = vset.pattern.permute.xlu0 0
  %423 = vperm.xlu0 %422, %v136
  %v424 = vpop.permute.xlu0 %423
  %425 = vset.pattern.permute.xlu0 0
  %426 = vperm.xlu0 %425, %v137
  %v427 = vpop.permute.xlu0 %426
  %428 = vset.pattern.permute.xlu0 0
  %429 = vperm.xlu0 %428, %v138
  %v430 = vpop.permute.xlu0 %429
  %431 = vset.pattern.permute.xlu0 0
  %432 = vperm.xlu0 %431, %v139
  %v433 = vpop.permute.xlu0 %432
  %434 = vset.pattern.permute.xlu0 0
  %435 = vperm.xlu0 %434, %v140
  %v436 = vpop.permute.xlu0 %435
  %437 = vset.pattern.permute.xlu0 0
  %438 = vperm.xlu0 %437, %v141
  %v439 = vpop.permute.xlu0 %438
  %440 = vset.pattern.permute.xlu0 0
  %441 = vperm.xlu0 %440, %v142
  %v442 = vpop.permute.xlu0 %441
  %443 = vset.pattern.permute.xlu0 0
  %444 = vperm.xlu0 %443, %v143
  %v445 = vpop.permute.xlu0 %444
  %446 = vset.pattern.permute.xlu0 0
  %447 = vperm.xlu0 %446, %v144
  %v448 = vpop.permute.xlu0 %447
  %449 = vset.pattern.permute.xlu0 0
  %450 = vperm.xlu0 %449, %v145
  %v451 = vpop.permute.xlu0 %450
  %452 = vset.pattern.permute.xlu0 0
  %453 = vperm.xlu0 %452, %v146
  %v454 = vpop.permute.xlu0 %453
  %455 = vset.pattern.permute.xlu0 0
  %456 = vperm.xlu0 %455, %v147
  %v457 = vpop.permute.xlu0 %456
  %458 = vset.pattern.permute.xlu0 0
  %459 = vperm.xlu0 %458, %v148
  %v460 = vpop.permute.xlu0 %459
  %461 = vset.pattern.permute.xlu0 0
  %462 = vperm.xlu0 %461, %v149
  %v463 = vpop.permute.xlu0 %462
  %464 = vset.pattern.permute.xlu0 0
  %465 = vperm.xlu0 %464, %v150
  %v466 = vpop.permute.xlu0 %465
  %467 = vset.pattern.permute.xlu0 0
  %468 = vperm.xlu0 %467, %v151
  %v469 = vpop.permute.xlu0 %468
  %470 = vset.pattern.permute.xlu0 0
  %471 = vperm.xlu0 %470, %v152
  %v472 = vpop.permute.xlu0 %471
  %vm473 = vcmp.eq.s32.totalorder %v22, %v283
  %vm474 = vcmp.eq.s32.totalorder %v23, %v283
  %vm475 = vcmp.eq.s32.totalorder %v22, %v286
  %vm476 = vcmp.eq.s32.totalorder %v23, %v286
  %vm477 = vcmp.eq.s32.totalorder %v22, %v289
  %vm478 = vcmp.eq.s32.totalorder %v23, %v289
  %vm479 = vcmp.eq.s32.totalorder %v22, %v292
  %vm480 = vcmp.eq.s32.totalorder %v23, %v292
  %vm481 = vcmp.eq.s32.totalorder %v22, %v295
  %vm482 = vcmp.eq.s32.totalorder %v23, %v295
  %vm483 = vcmp.eq.s32.totalorder %v22, %v298
  %vm484 = vcmp.eq.s32.totalorder %v23, %v298
  %vm485 = vcmp.eq.s32.totalorder %v22, %v301
  %vm486 = vcmp.eq.s32.totalorder %v23, %v301
  %vm487 = vcmp.eq.s32.totalorder %v22, %v304
  %vm488 = vcmp.eq.s32.totalorder %v23, %v304
  %vm489 = vcmp.eq.s32.totalorder %v22, %v307
  %vm490 = vcmp.eq.s32.totalorder %v23, %v307
  %vm491 = vcmp.eq.s32.totalorder %v22, %v310
  %vm492 = vcmp.eq.s32.totalorder %v23, %v310
  %vm493 = vcmp.eq.s32.totalorder %v22, %v313
  %vm494 = vcmp.eq.s32.totalorder %v23, %v313
  %vm495 = vcmp.eq.s32.totalorder %v22, %v316
  %vm496 = vcmp.eq.s32.totalorder %v23, %v316
  %vm497 = vcmp.eq.s32.totalorder %v22, %v319
  %vm498 = vcmp.eq.s32.totalorder %v23, %v319
  %vm499 = vcmp.eq.s32.totalorder %v22, %v322
  %vm500 = vcmp.eq.s32.totalorder %v23, %v322
  %vm501 = vcmp.eq.s32.totalorder %v22, %v325
  %vm502 = vcmp.eq.s32.totalorder %v23, %v325
  %vm503 = vcmp.eq.s32.totalorder %v22, %v328
  %vm504 = vcmp.eq.s32.totalorder %v23, %v328
  %vm505 = vcmp.eq.s32.totalorder %v22, %v331
  %vm506 = vcmp.eq.s32.totalorder %v23, %v331
  %vm507 = vcmp.eq.s32.totalorder %v22, %v334
  %vm508 = vcmp.eq.s32.totalorder %v23, %v334
  %vm509 = vcmp.eq.s32.totalorder %v22, %v337
  %vm510 = vcmp.eq.s32.totalorder %v23, %v337
  %vm511 = vcmp.eq.s32.totalorder %v22, %v340
  %vm512 = vcmp.eq.s32.totalorder %v23, %v340
  %vm513 = vcmp.eq.s32.totalorder %v22, %v343
  %vm514 = vcmp.eq.s32.totalorder %v23, %v343
  %vm515 = vcmp.eq.s32.totalorder %v22, %v346
  %vm516 = vcmp.eq.s32.totalorder %v23, %v346
  %vm517 = vcmp.eq.s32.totalorder %v22, %v349
  %vm518 = vcmp.eq.s32.totalorder %v23, %v349
  %vm519 = vcmp.eq.s32.totalorder %v22, %v352
  %vm520 = vcmp.eq.s32.totalorder %v23, %v352
  %vm521 = vcmp.eq.s32.totalorder %v22, %v355
  %vm522 = vcmp.eq.s32.totalorder %v23, %v355
  %vm523 = vcmp.eq.s32.totalorder %v22, %v358
  %vm524 = vcmp.eq.s32.totalorder %v23, %v358
  %vm525 = vcmp.eq.s32.totalorder %v22, %v361
  %vm526 = vcmp.eq.s32.totalorder %v23, %v361
  %vm527 = vcmp.eq.s32.totalorder %v22, %v364
  %vm528 = vcmp.eq.s32.totalorder %v23, %v364
  %vm529 = vcmp.eq.s32.totalorder %v22, %v367
  %vm530 = vcmp.eq.s32.totalorder %v23, %v367
  %vm531 = vcmp.eq.s32.totalorder %v22, %v370
  %vm532 = vcmp.eq.s32.totalorder %v23, %v370
  %vm533 = vcmp.eq.s32.totalorder %v22, %v373
  %vm534 = vcmp.eq.s32.totalorder %v23, %v373
  %vm535 = vcmp.eq.s32.totalorder %v22, %v376
  %vm536 = vcmp.eq.s32.totalorder %v23, %v376
  %vm537 = vcmp.eq.s32.totalorder %v22, %v379
  %vm538 = vcmp.eq.s32.totalorder %v23, %v379
  %vm539 = vcmp.eq.s32.totalorder %v22, %v382
  %vm540 = vcmp.eq.s32.totalorder %v23, %v382
  %vm541 = vcmp.eq.s32.totalorder %v22, %v385
  %vm542 = vcmp.eq.s32.totalorder %v23, %v385
  %vm543 = vcmp.eq.s32.totalorder %v22, %v388
  %vm544 = vcmp.eq.s32.totalorder %v23, %v388
  %vm545 = vcmp.eq.s32.totalorder %v22, %v391
  %vm546 = vcmp.eq.s32.totalorder %v23, %v391
  %vm547 = vcmp.eq.s32.totalorder %v22, %v394
  %vm548 = vcmp.eq.s32.totalorder %v23, %v394
  %vm549 = vcmp.eq.s32.totalorder %v22, %v397
  %vm550 = vcmp.eq.s32.totalorder %v23, %v397
  %vm551 = vcmp.eq.s32.totalorder %v22, %v400
  %vm552 = vcmp.eq.s32.totalorder %v23, %v400
  %vm553 = vcmp.eq.s32.totalorder %v22, %v403
  %vm554 = vcmp.eq.s32.totalorder %v23, %v403
  %vm555 = vcmp.eq.s32.totalorder %v22, %v406
  %vm556 = vcmp.eq.s32.totalorder %v23, %v406
  %vm557 = vcmp.eq.s32.totalorder %v22, %v409
  %vm558 = vcmp.eq.s32.totalorder %v23, %v409
  %vm559 = vcmp.eq.s32.totalorder %v22, %v412
  %vm560 = vcmp.eq.s32.totalorder %v23, %v412
  %vm561 = vcmp.eq.s32.totalorder %v22, %v415
  %vm562 = vcmp.eq.s32.totalorder %v23, %v415
  %vm563 = vcmp.eq.s32.totalorder %v22, %v418
  %vm564 = vcmp.eq.s32.totalorder %v23, %v418
  %vm565 = vcmp.eq.s32.totalorder %v22, %v421
  %vm566 = vcmp.eq.s32.totalorder %v23, %v421
  %vm567 = vcmp.eq.s32.totalorder %v22, %v424
  %vm568 = vcmp.eq.s32.totalorder %v23, %v424
  %vm569 = vcmp.eq.s32.totalorder %v22, %v427
  %vm570 = vcmp.eq.s32.totalorder %v23, %v427
  %vm571 = vcmp.eq.s32.totalorder %v22, %v430
  %vm572 = vcmp.eq.s32.totalorder %v23, %v430
  %vm573 = vcmp.eq.s32.totalorder %v22, %v433
  %vm574 = vcmp.eq.s32.totalorder %v23, %v433
  %vm575 = vcmp.eq.s32.totalorder %v22, %v436
  %vm576 = vcmp.eq.s32.totalorder %v23, %v436
  %vm577 = vcmp.eq.s32.totalorder %v22, %v439
  %vm578 = vcmp.eq.s32.totalorder %v23, %v439
  %vm579 = vcmp.eq.s32.totalorder %v22, %v442
  %vm580 = vcmp.eq.s32.totalorder %v23, %v442
  %vm581 = vcmp.eq.s32.totalorder %v22, %v445
  %vm582 = vcmp.eq.s32.totalorder %v23, %v445
  %vm583 = vcmp.eq.s32.totalorder %v22, %v448
  %vm584 = vcmp.eq.s32.totalorder %v23, %v448
  %vm585 = vcmp.eq.s32.totalorder %v22, %v451
  %vm586 = vcmp.eq.s32.totalorder %v23, %v451
  %vm587 = vcmp.eq.s32.totalorder %v22, %v454
  %vm588 = vcmp.eq.s32.totalorder %v23, %v454
  %vm589 = vcmp.eq.s32.totalorder %v22, %v457
  %vm590 = vcmp.eq.s32.totalorder %v23, %v457
  %vm591 = vcmp.eq.s32.totalorder %v22, %v460
  %vm592 = vcmp.eq.s32.totalorder %v23, %v460
  %vm593 = vcmp.eq.s32.totalorder %v22, %v463
  %vm594 = vcmp.eq.s32.totalorder %v23, %v463
  %vm595 = vcmp.eq.s32.totalorder %v22, %v466
  %vm596 = vcmp.eq.s32.totalorder %v23, %v466
  %vm597 = vcmp.eq.s32.totalorder %v22, %v469
  %vm598 = vcmp.eq.s32.totalorder %v23, %v469
  %vm599 = vcmp.eq.s32.totalorder %v22, %v472
  %vm600 = vcmp.eq.s32.totalorder %v23, %v472
  %v601 = vsel %vm473, 1, 0
  %v602 = vsel %vm474, 1, 0
  %v603 = vsel %vm475, 1, 0
  %v604 = vsel %vm476, 1, 0
  %v605 = vsel %vm477, 1, 0
  %v606 = vsel %vm478, 1, 0
  %v607 = vsel %vm479, 1, 0
  %v608 = vsel %vm480, 1, 0
  %v609 = vsel %vm481, 1, 0
  %v610 = vsel %vm482, 1, 0
  %v611 = vsel %vm483, 1, 0
  %v612 = vsel %vm484, 1, 0
  %v613 = vsel %vm485, 1, 0
  %v614 = vsel %vm486, 1, 0
  %v615 = vsel %vm487, 1, 0
  %v616 = vsel %vm488, 1, 0
  %v617 = vsel %vm489, 1, 0
  %v618 = vsel %vm490, 1, 0
  %v619 = vsel %vm491, 1, 0
  %v620 = vsel %vm492, 1, 0
  %v621 = vsel %vm493, 1, 0
  %v622 = vsel %vm494, 1, 0
  %v623 = vsel %vm495, 1, 0
  %v624 = vsel %vm496, 1, 0
  %v625 = vsel %vm497, 1, 0
  %v626 = vsel %vm498, 1, 0
  %v627 = vsel %vm499, 1, 0
  %v628 = vsel %vm500, 1, 0
  %v629 = vsel %vm501, 1, 0
  %v630 = vsel %vm502, 1, 0
  %v631 = vsel %vm503, 1, 0
  %v632 = vsel %vm504, 1, 0
  %v633 = vsel %vm505, 1, 0
  %v634 = vsel %vm506, 1, 0
  %v635 = vsel %vm507, 1, 0
  %v636 = vsel %vm508, 1, 0
  %v637 = vsel %vm509, 1, 0
  %v638 = vsel %vm510, 1, 0
  %v639 = vsel %vm511, 1, 0
  %v640 = vsel %vm512, 1, 0
  %v641 = vsel %vm513, 1, 0
  %v642 = vsel %vm514, 1, 0
  %v643 = vsel %vm515, 1, 0
  %v644 = vsel %vm516, 1, 0
  %v645 = vsel %vm517, 1, 0
  %v646 = vsel %vm518, 1, 0
  %v647 = vsel %vm519, 1, 0
  %v648 = vsel %vm520, 1, 0
  %v649 = vsel %vm521, 1, 0
  %v650 = vsel %vm522, 1, 0
  %v651 = vsel %vm523, 1, 0
  %v652 = vsel %vm524, 1, 0
  %v653 = vsel %vm525, 1, 0
  %v654 = vsel %vm526, 1, 0
  %v655 = vsel %vm527, 1, 0
  %v656 = vsel %vm528, 1, 0
  %v657 = vsel %vm529, 1, 0
  %v658 = vsel %vm530, 1, 0
  %v659 = vsel %vm531, 1, 0
  %v660 = vsel %vm532, 1, 0
  %v661 = vsel %vm533, 1, 0
  %v662 = vsel %vm534, 1, 0
  %v663 = vsel %vm535, 1, 0
  %v664 = vsel %vm536, 1, 0
  %v665 = vsel %vm537, 1, 0
  %v666 = vsel %vm538, 1, 0
  %v667 = vsel %vm539, 1, 0
  %v668 = vsel %vm540, 1, 0
  %v669 = vsel %vm541, 1, 0
  %v670 = vsel %vm542, 1, 0
  %v671 = vsel %vm543, 1, 0
  %v672 = vsel %vm544, 1, 0
  %v673 = vsel %vm545, 1, 0
  %v674 = vsel %vm546, 1, 0
  %v675 = vsel %vm547, 1, 0
  %v676 = vsel %vm548, 1, 0
  %v677 = vsel %vm549, 1, 0
  %v678 = vsel %vm550, 1, 0
  %v679 = vsel %vm551, 1, 0
  %v680 = vsel %vm552, 1, 0
  %v681 = vsel %vm553, 1, 0
  %v682 = vsel %vm554, 1, 0
  %v683 = vsel %vm555, 1, 0
  %v684 = vsel %vm556, 1, 0
  %v685 = vsel %vm557, 1, 0
  %v686 = vsel %vm558, 1, 0
  %v687 = vsel %vm559, 1, 0
  %v688 = vsel %vm560, 1, 0
  %v689 = vsel %vm561, 1, 0
  %v690 = vsel %vm562, 1, 0
  %v691 = vsel %vm563, 1, 0
  %v692 = vsel %vm564, 1, 0
  %v693 = vsel %vm565, 1, 0
  %v694 = vsel %vm566, 1, 0
  %v695 = vsel %vm567, 1, 0
  %v696 = vsel %vm568, 1, 0
  %v697 = vsel %vm569, 1, 0
  %v698 = vsel %vm570, 1, 0
  %v699 = vsel %vm571, 1, 0
  %v700 = vsel %vm572, 1, 0
  %v701 = vsel %vm573, 1, 0
  %v702 = vsel %vm574, 1, 0
  %v703 = vsel %vm575, 1, 0
  %v704 = vsel %vm576, 1, 0
  %v705 = vsel %vm577, 1, 0
  %v706 = vsel %vm578, 1, 0
  %v707 = vsel %vm579, 1, 0
  %v708 = vsel %vm580, 1, 0
  %v709 = vsel %vm581, 1, 0
  %v710 = vsel %vm582, 1, 0
  %v711 = vsel %vm583, 1, 0
  %v712 = vsel %vm584, 1, 0
  %v713 = vsel %vm585, 1, 0
  %v714 = vsel %vm586, 1, 0
  %v715 = vsel %vm587, 1, 0
  %v716 = vsel %vm588, 1, 0
  %v717 = vsel %vm589, 1, 0
  %v718 = vsel %vm590, 1, 0
  %v719 = vsel %vm591, 1, 0
  %v720 = vsel %vm592, 1, 0
  %v721 = vsel %vm593, 1, 0
  %v722 = vsel %vm594, 1, 0
  %v723 = vsel %vm595, 1, 0
  %v724 = vsel %vm596, 1, 0
  %v725 = vsel %vm597, 1, 0
  %v726 = vsel %vm598, 1, 0
  %v727 = vsel %vm599, 1, 0
  %v728 = vsel %vm600, 1, 0
  %v729 = vcvt.s32.f32 %v601
  %v730 = vcvt.s32.f32 %v602
  %v731 = vcvt.s32.f32 %v603
  %v732 = vcvt.s32.f32 %v604
  %v733 = vcvt.s32.f32 %v605
  %v734 = vcvt.s32.f32 %v606
  %v735 = vcvt.s32.f32 %v607
  %v736 = vcvt.s32.f32 %v608
  %v737 = vcvt.s32.f32 %v609
  %v738 = vcvt.s32.f32 %v610
  %v739 = vcvt.s32.f32 %v611
  %v740 = vcvt.s32.f32 %v612
  %v741 = vcvt.s32.f32 %v613
  %v742 = vcvt.s32.f32 %v614
  %v743 = vcvt.s32.f32 %v615
  %v744 = vcvt.s32.f32 %v616
  %v745 = vcvt.s32.f32 %v617
  %v746 = vcvt.s32.f32 %v618
  %v747 = vcvt.s32.f32 %v619
  %v748 = vcvt.s32.f32 %v620
  %v749 = vcvt.s32.f32 %v621
  %v750 = vcvt.s32.f32 %v622
  %v751 = vcvt.s32.f32 %v623
  %v752 = vcvt.s32.f32 %v624
  %v753 = vcvt.s32.f32 %v625
  %v754 = vcvt.s32.f32 %v626
  %v755 = vcvt.s32.f32 %v627
  %v756 = vcvt.s32.f32 %v628
  %v757 = vcvt.s32.f32 %v629
  %v758 = vcvt.s32.f32 %v630
  %v759 = vcvt.s32.f32 %v631
  %v760 = vcvt.s32.f32 %v632
  %v761 = vcvt.s32.f32 %v633
  %v762 = vcvt.s32.f32 %v634
  %v763 = vcvt.s32.f32 %v635
  %v764 = vcvt.s32.f32 %v636
  %v765 = vcvt.s32.f32 %v637
  %v766 = vcvt.s32.f32 %v638
  %v767 = vcvt.s32.f32 %v639
  %v768 = vcvt.s32.f32 %v640
  %v769 = vcvt.s32.f32 %v641
  %v770 = vcvt.s32.f32 %v642
  %v771 = vcvt.s32.f32 %v643
  %v772 = vcvt.s32.f32 %v644
  %v773 = vcvt.s32.f32 %v645
  %v774 = vcvt.s32.f32 %v646
  %v775 = vcvt.s32.f32 %v647
  %v776 = vcvt.s32.f32 %v648
  %v777 = vcvt.s32.f32 %v649
  %v778 = vcvt.s32.f32 %v650
  %v779 = vcvt.s32.f32 %v651
  %v780 = vcvt.s32.f32 %v652
  %v781 = vcvt.s32.f32 %v653
  %v782 = vcvt.s32.f32 %v654
  %v783 = vcvt.s32.f32 %v655
  %v784 = vcvt.s32.f32 %v656
  %v785 = vcvt.s32.f32 %v657
  %v786 = vcvt.s32.f32 %v658
  %v787 = vcvt.s32.f32 %v659
  %v788 = vcvt.s32.f32 %v660
  %v789 = vcvt.s32.f32 %v661
  %v790 = vcvt.s32.f32 %v662
  %v791 = vcvt.s32.f32 %v663
  %v792 = vcvt.s32.f32 %v664
  %v793 = vcvt.s32.f32 %v665
  %v794 = vcvt.s32.f32 %v666
  %v795 = vcvt.s32.f32 %v667
  %v796 = vcvt.s32.f32 %v668
  %v797 = vcvt.s32.f32 %v669
  %v798 = vcvt.s32.f32 %v670
  %v799 = vcvt.s32.f32 %v671
  %v800 = vcvt.s32.f32 %v672
  %v801 = vcvt.s32.f32 %v673
  %v802 = vcvt.s32.f32 %v674
  %v803 = vcvt.s32.f32 %v675
  %v804 = vcvt.s32.f32 %v676
  %v805 = vcvt.s32.f32 %v677
  %v806 = vcvt.s32.f32 %v678
  %v807 = vcvt.s32.f32 %v679
  %v808 = vcvt.s32.f32 %v680
  %v809 = vcvt.s32.f32 %v681
  %v810 = vcvt.s32.f32 %v682
  %v811 = vcvt.s32.f32 %v683
  %v812 = vcvt.s32.f32 %v684
  %v813 = vcvt.s32.f32 %v685
  %v814 = vcvt.s32.f32 %v686
  %v815 = vcvt.s32.f32 %v687
  %v816 = vcvt.s32.f32 %v688
  %v817 = vcvt.s32.f32 %v689
  %v818 = vcvt.s32.f32 %v690
  %v819 = vcvt.s32.f32 %v691
  %v820 = vcvt.s32.f32 %v692
  %v821 = vcvt.s32.f32 %v693
  %v822 = vcvt.s32.f32 %v694
  %v823 = vcvt.s32.f32 %v695
  %v824 = vcvt.s32.f32 %v696
  %v825 = vcvt.s32.f32 %v697
  %v826 = vcvt.s32.f32 %v698
  %v827 = vcvt.s32.f32 %v699
  %v828 = vcvt.s32.f32 %v700
  %v829 = vcvt.s32.f32 %v701
  %v830 = vcvt.s32.f32 %v702
  %v831 = vcvt.s32.f32 %v703
  %v832 = vcvt.s32.f32 %v704
  %v833 = vcvt.s32.f32 %v705
  %v834 = vcvt.s32.f32 %v706
  %v835 = vcvt.s32.f32 %v707
  %v836 = vcvt.s32.f32 %v708
  %v837 = vcvt.s32.f32 %v709
  %v838 = vcvt.s32.f32 %v710
  %v839 = vcvt.s32.f32 %v711
  %v840 = vcvt.s32.f32 %v712
  %v841 = vcvt.s32.f32 %v713
  %v842 = vcvt.s32.f32 %v714
  %v843 = vcvt.s32.f32 %v715
  %v844 = vcvt.s32.f32 %v716
  %v845 = vcvt.s32.f32 %v717
  %v846 = vcvt.s32.f32 %v718
  %v847 = vcvt.s32.f32 %v719
  %v848 = vcvt.s32.f32 %v720
  %v849 = vcvt.s32.f32 %v721
  %v850 = vcvt.s32.f32 %v722
  %v851 = vcvt.s32.f32 %v723
  %v852 = vcvt.s32.f32 %v724
  %v853 = vcvt.s32.f32 %v725
  %v854 = vcvt.s32.f32 %v726
  %v855 = vcvt.s32.f32 %v727
  %v856 = vcvt.s32.f32 %v728
  %857 = vset.pattern.permute.xlu0 0
  %858 = vperm.xlu0 %857, %v217
  %v859 = vpop.permute.xlu0 %858
  %860 = vset.pattern.permute.xlu0 0
  %861 = vperm.xlu0 %860, %v218
  %v862 = vpop.permute.xlu0 %861
  %863 = vset.pattern.permute.xlu0 0
  %864 = vperm.xlu0 %863, %v219
  %v865 = vpop.permute.xlu0 %864
  %866 = vset.pattern.permute.xlu0 0
  %867 = vperm.xlu0 %866, %v220
  %v868 = vpop.permute.xlu0 %867
  %869 = vset.pattern.permute.xlu0 0
  %870 = vperm.xlu0 %869, %v221
  %v871 = vpop.permute.xlu0 %870
  %872 = vset.pattern.permute.xlu0 0
  %873 = vperm.xlu0 %872, %v222
  %v874 = vpop.permute.xlu0 %873
  %875 = vset.pattern.permute.xlu0 0
  %876 = vperm.xlu0 %875, %v223
  %v877 = vpop.permute.xlu0 %876
  %878 = vset.pattern.permute.xlu0 0
  %879 = vperm.xlu0 %878, %v224
  %v880 = vpop.permute.xlu0 %879
  %881 = vset.pattern.permute.xlu0 0
  %882 = vperm.xlu0 %881, %v225
  %v883 = vpop.permute.xlu0 %882
  %884 = vset.pattern.permute.xlu0 0
  %885 = vperm.xlu0 %884, %v226
  %v886 = vpop.permute.xlu0 %885
  %887 = vset.pattern.permute.xlu0 0
  %888 = vperm.xlu0 %887, %v227
  %v889 = vpop.permute.xlu0 %888
  %890 = vset.pattern.permute.xlu0 0
  %891 = vperm.xlu0 %890, %v228
  %v892 = vpop.permute.xlu0 %891
  %893 = vset.pattern.permute.xlu0 0
  %894 = vperm.xlu0 %893, %v229
  %v895 = vpop.permute.xlu0 %894
  %896 = vset.pattern.permute.xlu0 0
  %897 = vperm.xlu0 %896, %v230
  %v898 = vpop.permute.xlu0 %897
  %899 = vset.pattern.permute.xlu0 0
  %900 = vperm.xlu0 %899, %v231
  %v901 = vpop.permute.xlu0 %900
  %902 = vset.pattern.permute.xlu0 0
  %903 = vperm.xlu0 %902, %v232
  %v904 = vpop.permute.xlu0 %903
  %905 = vset.pattern.permute.xlu0 0
  %906 = vperm.xlu0 %905, %v233
  %v907 = vpop.permute.xlu0 %906
  %908 = vset.pattern.permute.xlu0 0
  %909 = vperm.xlu0 %908, %v234
  %v910 = vpop.permute.xlu0 %909
  %911 = vset.pattern.permute.xlu0 0
  %912 = vperm.xlu0 %911, %v235
  %v913 = vpop.permute.xlu0 %912
  %914 = vset.pattern.permute.xlu0 0
  %915 = vperm.xlu0 %914, %v236
  %v916 = vpop.permute.xlu0 %915
  %917 = vset.pattern.permute.xlu0 0
  %918 = vperm.xlu0 %917, %v237
  %v919 = vpop.permute.xlu0 %918
  %920 = vset.pattern.permute.xlu0 0
  %921 = vperm.xlu0 %920, %v238
  %v922 = vpop.permute.xlu0 %921
  %923 = vset.pattern.permute.xlu0 0
  %924 = vperm.xlu0 %923, %v239
  %v925 = vpop.permute.xlu0 %924
  %926 = vset.pattern.permute.xlu0 0
  %927 = vperm.xlu0 %926, %v240
  %v928 = vpop.permute.xlu0 %927
  %929 = vset.pattern.permute.xlu0 0
  %930 = vperm.xlu0 %929, %v241
  %v931 = vpop.permute.xlu0 %930
  %932 = vset.pattern.permute.xlu0 0
  %933 = vperm.xlu0 %932, %v242
  %v934 = vpop.permute.xlu0 %933
  %935 = vset.pattern.permute.xlu0 0
  %936 = vperm.xlu0 %935, %v243
  %v937 = vpop.permute.xlu0 %936
  %938 = vset.pattern.permute.xlu0 0
  %939 = vperm.xlu0 %938, %v244
  %v940 = vpop.permute.xlu0 %939
  %941 = vset.pattern.permute.xlu0 0
  %942 = vperm.xlu0 %941, %v245
  %v943 = vpop.permute.xlu0 %942
  %944 = vset.pattern.permute.xlu0 0
  %945 = vperm.xlu0 %944, %v246
  %v946 = vpop.permute.xlu0 %945
  %947 = vset.pattern.permute.xlu0 0
  %948 = vperm.xlu0 %947, %v247
  %v949 = vpop.permute.xlu0 %948
  %950 = vset.pattern.permute.xlu0 0
  %951 = vperm.xlu0 %950, %v248
  %v952 = vpop.permute.xlu0 %951
  %953 = vset.pattern.permute.xlu0 0
  %954 = vperm.xlu0 %953, %v249
  %v955 = vpop.permute.xlu0 %954
  %956 = vset.pattern.permute.xlu0 0
  %957 = vperm.xlu0 %956, %v250
  %v958 = vpop.permute.xlu0 %957
  %959 = vset.pattern.permute.xlu0 0
  %960 = vperm.xlu0 %959, %v251
  %v961 = vpop.permute.xlu0 %960
  %962 = vset.pattern.permute.xlu0 0
  %963 = vperm.xlu0 %962, %v252
  %v964 = vpop.permute.xlu0 %963
  %965 = vset.pattern.permute.xlu0 0
  %966 = vperm.xlu0 %965, %v253
  %v967 = vpop.permute.xlu0 %966
  %968 = vset.pattern.permute.xlu0 0
  %969 = vperm.xlu0 %968, %v254
  %v970 = vpop.permute.xlu0 %969
  %971 = vset.pattern.permute.xlu0 0
  %972 = vperm.xlu0 %971, %v255
  %v973 = vpop.permute.xlu0 %972
  %974 = vset.pattern.permute.xlu0 0
  %975 = vperm.xlu0 %974, %v256
  %v976 = vpop.permute.xlu0 %975
  %977 = vset.pattern.permute.xlu0 0
  %978 = vperm.xlu0 %977, %v257
  %v979 = vpop.permute.xlu0 %978
  %980 = vset.pattern.permute.xlu0 0
  %981 = vperm.xlu0 %980, %v258
  %v982 = vpop.permute.xlu0 %981
  %983 = vset.pattern.permute.xlu0 0
  %984 = vperm.xlu0 %983, %v259
  %v985 = vpop.permute.xlu0 %984
  %986 = vset.pattern.permute.xlu0 0
  %987 = vperm.xlu0 %986, %v260
  %v988 = vpop.permute.xlu0 %987
  %989 = vset.pattern.permute.xlu0 0
  %990 = vperm.xlu0 %989, %v261
  %v991 = vpop.permute.xlu0 %990
  %992 = vset.pattern.permute.xlu0 0
  %993 = vperm.xlu0 %992, %v262
  %v994 = vpop.permute.xlu0 %993
  %995 = vset.pattern.permute.xlu0 0
  %996 = vperm.xlu0 %995, %v263
  %v997 = vpop.permute.xlu0 %996
  %998 = vset.pattern.permute.xlu0 0
  %999 = vperm.xlu0 %998, %v264
  %v1000 = vpop.permute.xlu0 %999
  %1001 = vset.pattern.permute.xlu0 0
  %1002 = vperm.xlu0 %1001, %v265
  %v1003 = vpop.permute.xlu0 %1002
  %1004 = vset.pattern.permute.xlu0 0
  %1005 = vperm.xlu0 %1004, %v266
  %v1006 = vpop.permute.xlu0 %1005
  %1007 = vset.pattern.permute.xlu0 0
  %1008 = vperm.xlu0 %1007, %v267
  %v1009 = vpop.permute.xlu0 %1008
  %1010 = vset.pattern.permute.xlu0 0
  %1011 = vperm.xlu0 %1010, %v268
  %v1012 = vpop.permute.xlu0 %1011
  %1013 = vset.pattern.permute.xlu0 0
  %1014 = vperm.xlu0 %1013, %v269
  %v1015 = vpop.permute.xlu0 %1014
  %1016 = vset.pattern.permute.xlu0 0
  %1017 = vperm.xlu0 %1016, %v270
  %v1018 = vpop.permute.xlu0 %1017
  %1019 = vset.pattern.permute.xlu0 0
  %1020 = vperm.xlu0 %1019, %v271
  %v1021 = vpop.permute.xlu0 %1020
  %1022 = vset.pattern.permute.xlu0 0
  %1023 = vperm.xlu0 %1022, %v272
  %v1024 = vpop.permute.xlu0 %1023
  %1025 = vset.pattern.permute.xlu0 0
  %1026 = vperm.xlu0 %1025, %v273
  %v1027 = vpop.permute.xlu0 %1026
  %1028 = vset.pattern.permute.xlu0 0
  %1029 = vperm.xlu0 %1028, %v274
  %v1030 = vpop.permute.xlu0 %1029
  %1031 = vset.pattern.permute.xlu0 0
  %1032 = vperm.xlu0 %1031, %v275
  %v1033 = vpop.permute.xlu0 %1032
  %1034 = vset.pattern.permute.xlu0 0
  %1035 = vperm.xlu0 %1034, %v276
  %v1036 = vpop.permute.xlu0 %1035
  %1037 = vset.pattern.permute.xlu0 0
  %1038 = vperm.xlu0 %1037, %v277
  %v1039 = vpop.permute.xlu0 %1038
  %1040 = vset.pattern.permute.xlu0 0
  %1041 = vperm.xlu0 %1040, %v278
  %v1042 = vpop.permute.xlu0 %1041
  %1043 = vset.pattern.permute.xlu0 0
  %1044 = vperm.xlu0 %1043, %v279
  %v1045 = vpop.permute.xlu0 %1044
  %1046 = vset.pattern.permute.xlu0 0
  %1047 = vperm.xlu0 %1046, %v280
  %v1048 = vpop.permute.xlu0 %1047
  %vm1049 = vcmp.eq.s32.totalorder %v22, %v859
  %vm1050 = vcmp.eq.s32.totalorder %v23, %v859
  %vm1051 = vcmp.eq.s32.totalorder %v22, %v862
  %vm1052 = vcmp.eq.s32.totalorder %v23, %v862
  %vm1053 = vcmp.eq.s32.totalorder %v22, %v865
  %vm1054 = vcmp.eq.s32.totalorder %v23, %v865
  %vm1055 = vcmp.eq.s32.totalorder %v22, %v868
  %vm1056 = vcmp.eq.s32.totalorder %v23, %v868
  %vm1057 = vcmp.eq.s32.totalorder %v22, %v871
  %vm1058 = vcmp.eq.s32.totalorder %v23, %v871
  %vm1059 = vcmp.eq.s32.totalorder %v22, %v874
  %vm1060 = vcmp.eq.s32.totalorder %v23, %v874
  %vm1061 = vcmp.eq.s32.totalorder %v22, %v877
  %vm1062 = vcmp.eq.s32.totalorder %v23, %v877
  %vm1063 = vcmp.eq.s32.totalorder %v22, %v880
  %vm1064 = vcmp.eq.s32.totalorder %v23, %v880
  %vm1065 = vcmp.eq.s32.totalorder %v22, %v883
  %vm1066 = vcmp.eq.s32.totalorder %v23, %v883
  %vm1067 = vcmp.eq.s32.totalorder %v22, %v886
  %vm1068 = vcmp.eq.s32.totalorder %v23, %v886
  %vm1069 = vcmp.eq.s32.totalorder %v22, %v889
  %vm1070 = vcmp.eq.s32.totalorder %v23, %v889
  %vm1071 = vcmp.eq.s32.totalorder %v22, %v892
  %vm1072 = vcmp.eq.s32.totalorder %v23, %v892
  %vm1073 = vcmp.eq.s32.totalorder %v22, %v895
  %vm1074 = vcmp.eq.s32.totalorder %v23, %v895
  %vm1075 = vcmp.eq.s32.totalorder %v22, %v898
  %vm1076 = vcmp.eq.s32.totalorder %v23, %v898
  %vm1077 = vcmp.eq.s32.totalorder %v22, %v901
  %vm1078 = vcmp.eq.s32.totalorder %v23, %v901
  %vm1079 = vcmp.eq.s32.totalorder %v22, %v904
  %vm1080 = vcmp.eq.s32.totalorder %v23, %v904
  %vm1081 = vcmp.eq.s32.totalorder %v22, %v907
  %vm1082 = vcmp.eq.s32.totalorder %v23, %v907
  %vm1083 = vcmp.eq.s32.totalorder %v22, %v910
  %vm1084 = vcmp.eq.s32.totalorder %v23, %v910
  %vm1085 = vcmp.eq.s32.totalorder %v22, %v913
  %vm1086 = vcmp.eq.s32.totalorder %v23, %v913
  %vm1087 = vcmp.eq.s32.totalorder %v22, %v916
  %vm1088 = vcmp.eq.s32.totalorder %v23, %v916
  %vm1089 = vcmp.eq.s32.totalorder %v22, %v919
  %vm1090 = vcmp.eq.s32.totalorder %v23, %v919
  %vm1091 = vcmp.eq.s32.totalorder %v22, %v922
  %vm1092 = vcmp.eq.s32.totalorder %v23, %v922
  %vm1093 = vcmp.eq.s32.totalorder %v22, %v925
  %vm1094 = vcmp.eq.s32.totalorder %v23, %v925
  %vm1095 = vcmp.eq.s32.totalorder %v22, %v928
  %vm1096 = vcmp.eq.s32.totalorder %v23, %v928
  %vm1097 = vcmp.eq.s32.totalorder %v22, %v931
  %vm1098 = vcmp.eq.s32.totalorder %v23, %v931
  %vm1099 = vcmp.eq.s32.totalorder %v22, %v934
  %vm1100 = vcmp.eq.s32.totalorder %v23, %v934
  %vm1101 = vcmp.eq.s32.totalorder %v22, %v937
  %vm1102 = vcmp.eq.s32.totalorder %v23, %v937
  %vm1103 = vcmp.eq.s32.totalorder %v22, %v940
  %vm1104 = vcmp.eq.s32.totalorder %v23, %v940
  %vm1105 = vcmp.eq.s32.totalorder %v22, %v943
  %vm1106 = vcmp.eq.s32.totalorder %v23, %v943
  %vm1107 = vcmp.eq.s32.totalorder %v22, %v946
  %vm1108 = vcmp.eq.s32.totalorder %v23, %v946
  %vm1109 = vcmp.eq.s32.totalorder %v22, %v949
  %vm1110 = vcmp.eq.s32.totalorder %v23, %v949
  %vm1111 = vcmp.eq.s32.totalorder %v22, %v952
  %vm1112 = vcmp.eq.s32.totalorder %v23, %v952
  %vm1113 = vcmp.eq.s32.totalorder %v22, %v955
  %vm1114 = vcmp.eq.s32.totalorder %v23, %v955
  %vm1115 = vcmp.eq.s32.totalorder %v22, %v958
  %vm1116 = vcmp.eq.s32.totalorder %v23, %v958
  %vm1117 = vcmp.eq.s32.totalorder %v22, %v961
  %vm1118 = vcmp.eq.s32.totalorder %v23, %v961
  %vm1119 = vcmp.eq.s32.totalorder %v22, %v964
  %vm1120 = vcmp.eq.s32.totalorder %v23, %v964
  %vm1121 = vcmp.eq.s32.totalorder %v22, %v967
  %vm1122 = vcmp.eq.s32.totalorder %v23, %v967
  %vm1123 = vcmp.eq.s32.totalorder %v22, %v970
  %vm1124 = vcmp.eq.s32.totalorder %v23, %v970
  %vm1125 = vcmp.eq.s32.totalorder %v22, %v973
  %vm1126 = vcmp.eq.s32.totalorder %v23, %v973
  %vm1127 = vcmp.eq.s32.totalorder %v22, %v976
  %vm1128 = vcmp.eq.s32.totalorder %v23, %v976
  %vm1129 = vcmp.eq.s32.totalorder %v22, %v979
  %vm1130 = vcmp.eq.s32.totalorder %v23, %v979
  %vm1131 = vcmp.eq.s32.totalorder %v22, %v982
  %vm1132 = vcmp.eq.s32.totalorder %v23, %v982
  %vm1133 = vcmp.eq.s32.totalorder %v22, %v985
  %vm1134 = vcmp.eq.s32.totalorder %v23, %v985
  %vm1135 = vcmp.eq.s32.totalorder %v22, %v988
  %vm1136 = vcmp.eq.s32.totalorder %v23, %v988
  %vm1137 = vcmp.eq.s32.totalorder %v22, %v991
  %vm1138 = vcmp.eq.s32.totalorder %v23, %v991
  %vm1139 = vcmp.eq.s32.totalorder %v22, %v994
  %vm1140 = vcmp.eq.s32.totalorder %v23, %v994
  %vm1141 = vcmp.eq.s32.totalorder %v22, %v997
  %vm1142 = vcmp.eq.s32.totalorder %v23, %v997
  %vm1143 = vcmp.eq.s32.totalorder %v22, %v1000
  %vm1144 = vcmp.eq.s32.totalorder %v23, %v1000
  %vm1145 = vcmp.eq.s32.totalorder %v22, %v1003
  %vm1146 = vcmp.eq.s32.totalorder %v23, %v1003
  %vm1147 = vcmp.eq.s32.totalorder %v22, %v1006
  %vm1148 = vcmp.eq.s32.totalorder %v23, %v1006
  %vm1149 = vcmp.eq.s32.totalorder %v22, %v1009
  %vm1150 = vcmp.eq.s32.totalorder %v23, %v1009
  %vm1151 = vcmp.eq.s32.totalorder %v22, %v1012
  %vm1152 = vcmp.eq.s32.totalorder %v23, %v1012
  %vm1153 = vcmp.eq.s32.totalorder %v22, %v1015
  %vm1154 = vcmp.eq.s32.totalorder %v23, %v1015
  %vm1155 = vcmp.eq.s32.totalorder %v22, %v1018
  %vm1156 = vcmp.eq.s32.totalorder %v23, %v1018
  %vm1157 = vcmp.eq.s32.totalorder %v22, %v1021
  %vm1158 = vcmp.eq.s32.totalorder %v23, %v1021
  %vm1159 = vcmp.eq.s32.totalorder %v22, %v1024
  %vm1160 = vcmp.eq.s32.totalorder %v23, %v1024
  %vm1161 = vcmp.eq.s32.totalorder %v22, %v1027
  %vm1162 = vcmp.eq.s32.totalorder %v23, %v1027
  %vm1163 = vcmp.eq.s32.totalorder %v22, %v1030
  %vm1164 = vcmp.eq.s32.totalorder %v23, %v1030
  %vm1165 = vcmp.eq.s32.totalorder %v22, %v1033
  %vm1166 = vcmp.eq.s32.totalorder %v23, %v1033
  %vm1167 = vcmp.eq.s32.totalorder %v22, %v1036
  %vm1168 = vcmp.eq.s32.totalorder %v23, %v1036
  %vm1169 = vcmp.eq.s32.totalorder %v22, %v1039
  %vm1170 = vcmp.eq.s32.totalorder %v23, %v1039
  %vm1171 = vcmp.eq.s32.totalorder %v22, %v1042
  %vm1172 = vcmp.eq.s32.totalorder %v23, %v1042
  %vm1173 = vcmp.eq.s32.totalorder %v22, %v1045
  %vm1174 = vcmp.eq.s32.totalorder %v23, %v1045
  %vm1175 = vcmp.eq.s32.totalorder %v22, %v1048
  %vm1176 = vcmp.eq.s32.totalorder %v23, %v1048
  %v1177 = vsel %vm1049, 1, 0
  %v1178 = vsel %vm1050, 1, 0
  %v1179 = vsel %vm1051, 1, 0
  %v1180 = vsel %vm1052, 1, 0
  %v1181 = vsel %vm1053, 1, 0
  %v1182 = vsel %vm1054, 1, 0
  %v1183 = vsel %vm1055, 1, 0
  %v1184 = vsel %vm1056, 1, 0
  %v1185 = vsel %vm1057, 1, 0
  %v1186 = vsel %vm1058, 1, 0
  %v1187 = vsel %vm1059, 1, 0
  %v1188 = vsel %vm1060, 1, 0
  %v1189 = vsel %vm1061, 1, 0
  %v1190 = vsel %vm1062, 1, 0
  %v1191 = vsel %vm1063, 1, 0
  %v1192 = vsel %vm1064, 1, 0
  %v1193 = vsel %vm1065, 1, 0
  %v1194 = vsel %vm1066, 1, 0
  %v1195 = vsel %vm1067, 1, 0
  %v1196 = vsel %vm1068, 1, 0
  %v1197 = vsel %vm1069, 1, 0
  %v1198 = vsel %vm1070, 1, 0
  %v1199 = vsel %vm1071, 1, 0
  %v1200 = vsel %vm1072, 1, 0
  %v1201 = vsel %vm1073, 1, 0
  %v1202 = vsel %vm1074, 1, 0
  %v1203 = vsel %vm1075, 1, 0
  %v1204 = vsel %vm1076, 1, 0
  %v1205 = vsel %vm1077, 1, 0
  %v1206 = vsel %vm1078, 1, 0
  %v1207 = vsel %vm1079, 1, 0
  %v1208 = vsel %vm1080, 1, 0
  %v1209 = vsel %vm1081, 1, 0
  %v1210 = vsel %vm1082, 1, 0
  %v1211 = vsel %vm1083, 1, 0
  %v1212 = vsel %vm1084, 1, 0
  %v1213 = vsel %vm1085, 1, 0
  %v1214 = vsel %vm1086, 1, 0
  %v1215 = vsel %vm1087, 1, 0
  %v1216 = vsel %vm1088, 1, 0
  %v1217 = vsel %vm1089, 1, 0
  %v1218 = vsel %vm1090, 1, 0
  %v1219 = vsel %vm1091, 1, 0
  %v1220 = vsel %vm1092, 1, 0
  %v1221 = vsel %vm1093, 1, 0
  %v1222 = vsel %vm1094, 1, 0
  %v1223 = vsel %vm1095, 1, 0
  %v1224 = vsel %vm1096, 1, 0
  %v1225 = vsel %vm1097, 1, 0
  %v1226 = vsel %vm1098, 1, 0
  %v1227 = vsel %vm1099, 1, 0
  %v1228 = vsel %vm1100, 1, 0
  %v1229 = vsel %vm1101, 1, 0
  %v1230 = vsel %vm1102, 1, 0
  %v1231 = vsel %vm1103, 1, 0
  %v1232 = vsel %vm1104, 1, 0
  %v1233 = vsel %vm1105, 1, 0
  %v1234 = vsel %vm1106, 1, 0
  %v1235 = vsel %vm1107, 1, 0
  %v1236 = vsel %vm1108, 1, 0
  %v1237 = vsel %vm1109, 1, 0
  %v1238 = vsel %vm1110, 1, 0
  %v1239 = vsel %vm1111, 1, 0
  %v1240 = vsel %vm1112, 1, 0
  %v1241 = vsel %vm1113, 1, 0
  %v1242 = vsel %vm1114, 1, 0
  %v1243 = vsel %vm1115, 1, 0
  %v1244 = vsel %vm1116, 1, 0
  %v1245 = vsel %vm1117, 1, 0
  %v1246 = vsel %vm1118, 1, 0
  %v1247 = vsel %vm1119, 1, 0
  %v1248 = vsel %vm1120, 1, 0
  %v1249 = vsel %vm1121, 1, 0
  %v1250 = vsel %vm1122, 1, 0
  %v1251 = vsel %vm1123, 1, 0
  %v1252 = vsel %vm1124, 1, 0
  %v1253 = vsel %vm1125, 1, 0
  %v1254 = vsel %vm1126, 1, 0
  %v1255 = vsel %vm1127, 1, 0
  %v1256 = vsel %vm1128, 1, 0
  %v1257 = vsel %vm1129, 1, 0
  %v1258 = vsel %vm1130, 1, 0
  %v1259 = vsel %vm1131, 1, 0
  %v1260 = vsel %vm1132, 1, 0
  %v1261 = vsel %vm1133, 1, 0
  %v1262 = vsel %vm1134, 1, 0
  %v1263 = vsel %vm1135, 1, 0
  %v1264 = vsel %vm1136, 1, 0
  %v1265 = vsel %vm1137, 1, 0
  %v1266 = vsel %vm1138, 1, 0
  %v1267 = vsel %vm1139, 1, 0
  %v1268 = vsel %vm1140, 1, 0
  %v1269 = vsel %vm1141, 1, 0
  %v1270 = vsel %vm1142, 1, 0
  %v1271 = vsel %vm1143, 1, 0
  %v1272 = vsel %vm1144, 1, 0
  %v1273 = vsel %vm1145, 1, 0
  %v1274 = vsel %vm1146, 1, 0
  %v1275 = vsel %vm1147, 1, 0
  %v1276 = vsel %vm1148, 1, 0
  %v1277 = vsel %vm1149, 1, 0
  %v1278 = vsel %vm1150, 1, 0
  %v1279 = vsel %vm1151, 1, 0
  %v1280 = vsel %vm1152, 1, 0
  %v1281 = vsel %vm1153, 1, 0
  %v1282 = vsel %vm1154, 1, 0
  %v1283 = vsel %vm1155, 1, 0
  %v1284 = vsel %vm1156, 1, 0
  %v1285 = vsel %vm1157, 1, 0
  %v1286 = vsel %vm1158, 1, 0
  %v1287 = vsel %vm1159, 1, 0
  %v1288 = vsel %vm1160, 1, 0
  %v1289 = vsel %vm1161, 1, 0
  %v1290 = vsel %vm1162, 1, 0
  %v1291 = vsel %vm1163, 1, 0
  %v1292 = vsel %vm1164, 1, 0
  %v1293 = vsel %vm1165, 1, 0
  %v1294 = vsel %vm1166, 1, 0
  %v1295 = vsel %vm1167, 1, 0
  %v1296 = vsel %vm1168, 1, 0
  %v1297 = vsel %vm1169, 1, 0
  %v1298 = vsel %vm1170, 1, 0
  %v1299 = vsel %vm1171, 1, 0
  %v1300 = vsel %vm1172, 1, 0
  %v1301 = vsel %vm1173, 1, 0
  %v1302 = vsel %vm1174, 1, 0
  %v1303 = vsel %vm1175, 1, 0
  %v1304 = vsel %vm1176, 1, 0
  %v1305 = vcvt.s32.f32 %v1177
  %v1306 = vcvt.s32.f32 %v1178
  %v1307 = vcvt.s32.f32 %v1179
  %v1308 = vcvt.s32.f32 %v1180
  %v1309 = vcvt.s32.f32 %v1181
  %v1310 = vcvt.s32.f32 %v1182
  %v1311 = vcvt.s32.f32 %v1183
  %v1312 = vcvt.s32.f32 %v1184
  %v1313 = vcvt.s32.f32 %v1185
  %v1314 = vcvt.s32.f32 %v1186
  %v1315 = vcvt.s32.f32 %v1187
  %v1316 = vcvt.s32.f32 %v1188
  %v1317 = vcvt.s32.f32 %v1189
  %v1318 = vcvt.s32.f32 %v1190
  %v1319 = vcvt.s32.f32 %v1191
  %v1320 = vcvt.s32.f32 %v1192
  %v1321 = vcvt.s32.f32 %v1193
  %v1322 = vcvt.s32.f32 %v1194
  %v1323 = vcvt.s32.f32 %v1195
  %v1324 = vcvt.s32.f32 %v1196
  %v1325 = vcvt.s32.f32 %v1197
  %v1326 = vcvt.s32.f32 %v1198
  %v1327 = vcvt.s32.f32 %v1199
  %v1328 = vcvt.s32.f32 %v1200
  %v1329 = vcvt.s32.f32 %v1201
  %v1330 = vcvt.s32.f32 %v1202
  %v1331 = vcvt.s32.f32 %v1203
  %v1332 = vcvt.s32.f32 %v1204
  %v1333 = vcvt.s32.f32 %v1205
  %v1334 = vcvt.s32.f32 %v1206
  %v1335 = vcvt.s32.f32 %v1207
  %v1336 = vcvt.s32.f32 %v1208
  %v1337 = vcvt.s32.f32 %v1209
  %v1338 = vcvt.s32.f32 %v1210
  %v1339 = vcvt.s32.f32 %v1211
  %v1340 = vcvt.s32.f32 %v1212
  %v1341 = vcvt.s32.f32 %v1213
  %v1342 = vcvt.s32.f32 %v1214
  %v1343 = vcvt.s32.f32 %v1215
  %v1344 = vcvt.s32.f32 %v1216
  %v1345 = vcvt.s32.f32 %v1217
  %v1346 = vcvt.s32.f32 %v1218
  %v1347 = vcvt.s32.f32 %v1219
  %v1348 = vcvt.s32.f32 %v1220
  %v1349 = vcvt.s32.f32 %v1221
  %v1350 = vcvt.s32.f32 %v1222
  %v1351 = vcvt.s32.f32 %v1223
  %v1352 = vcvt.s32.f32 %v1224
  %v1353 = vcvt.s32.f32 %v1225
  %v1354 = vcvt.s32.f32 %v1226
  %v1355 = vcvt.s32.f32 %v1227
  %v1356 = vcvt.s32.f32 %v1228
  %v1357 = vcvt.s32.f32 %v1229
  %v1358 = vcvt.s32.f32 %v1230
  %v1359 = vcvt.s32.f32 %v1231
  %v1360 = vcvt.s32.f32 %v1232
  %v1361 = vcvt.s32.f32 %v1233
  %v1362 = vcvt.s32.f32 %v1234
  %v1363 = vcvt.s32.f32 %v1235
  %v1364 = vcvt.s32.f32 %v1236
  %v1365 = vcvt.s32.f32 %v1237
  %v1366 = vcvt.s32.f32 %v1238
  %v1367 = vcvt.s32.f32 %v1239
  %v1368 = vcvt.s32.f32 %v1240
  %v1369 = vcvt.s32.f32 %v1241
  %v1370 = vcvt.s32.f32 %v1242
  %v1371 = vcvt.s32.f32 %v1243
  %v1372 = vcvt.s32.f32 %v1244
  %v1373 = vcvt.s32.f32 %v1245
  %v1374 = vcvt.s32.f32 %v1246
  %v1375 = vcvt.s32.f32 %v1247
  %v1376 = vcvt.s32.f32 %v1248
  %v1377 = vcvt.s32.f32 %v1249
  %v1378 = vcvt.s32.f32 %v1250
  %v1379 = vcvt.s32.f32 %v1251
  %v1380 = vcvt.s32.f32 %v1252
  %v1381 = vcvt.s32.f32 %v1253
  %v1382 = vcvt.s32.f32 %v1254
  %v1383 = vcvt.s32.f32 %v1255
  %v1384 = vcvt.s32.f32 %v1256
  %v1385 = vcvt.s32.f32 %v1257
  %v1386 = vcvt.s32.f32 %v1258
  %v1387 = vcvt.s32.f32 %v1259
  %v1388 = vcvt.s32.f32 %v1260
  %v1389 = vcvt.s32.f32 %v1261
  %v1390 = vcvt.s32.f32 %v1262
  %v1391 = vcvt.s32.f32 %v1263
  %v1392 = vcvt.s32.f32 %v1264
  %v1393 = vcvt.s32.f32 %v1265
  %v1394 = vcvt.s32.f32 %v1266
  %v1395 = vcvt.s32.f32 %v1267
  %v1396 = vcvt.s32.f32 %v1268
  %v1397 = vcvt.s32.f32 %v1269
  %v1398 = vcvt.s32.f32 %v1270
  %v1399 = vcvt.s32.f32 %v1271
  %v1400 = vcvt.s32.f32 %v1272
  %v1401 = vcvt.s32.f32 %v1273
  %v1402 = vcvt.s32.f32 %v1274
  %v1403 = vcvt.s32.f32 %v1275
  %v1404 = vcvt.s32.f32 %v1276
  %v1405 = vcvt.s32.f32 %v1277
  %v1406 = vcvt.s32.f32 %v1278
  %v1407 = vcvt.s32.f32 %v1279
  %v1408 = vcvt.s32.f32 %v1280
  %v1409 = vcvt.s32.f32 %v1281
  %v1410 = vcvt.s32.f32 %v1282
  %v1411 = vcvt.s32.f32 %v1283
  %v1412 = vcvt.s32.f32 %v1284
  %v1413 = vcvt.s32.f32 %v1285
  %v1414 = vcvt.s32.f32 %v1286
  %v1415 = vcvt.s32.f32 %v1287
  %v1416 = vcvt.s32.f32 %v1288
  %v1417 = vcvt.s32.f32 %v1289
  %v1418 = vcvt.s32.f32 %v1290
  %v1419 = vcvt.s32.f32 %v1291
  %v1420 = vcvt.s32.f32 %v1292
  %v1421 = vcvt.s32.f32 %v1293
  %v1422 = vcvt.s32.f32 %v1294
  %v1423 = vcvt.s32.f32 %v1295
  %v1424 = vcvt.s32.f32 %v1296
  %v1425 = vcvt.s32.f32 %v1297
  %v1426 = vcvt.s32.f32 %v1298
  %v1427 = vcvt.s32.f32 %v1299
  %v1428 = vcvt.s32.f32 %v1300
  %v1429 = vcvt.s32.f32 %v1301
  %v1430 = vcvt.s32.f32 %v1302
  %v1431 = vcvt.s32.f32 %v1303
  %v1432 = vcvt.s32.f32 %v1304
  %v1433 = vsub.f32 %v729, %v1305
  %v1434 = vsub.f32 %v730, %v1306
  %v1435 = vsub.f32 %v731, %v1307
  %v1436 = vsub.f32 %v732, %v1308
  %v1437 = vsub.f32 %v733, %v1309
  %v1438 = vsub.f32 %v734, %v1310
  %v1439 = vsub.f32 %v735, %v1311
  %v1440 = vsub.f32 %v736, %v1312
  %v1441 = vsub.f32 %v737, %v1313
  %v1442 = vsub.f32 %v738, %v1314
  %v1443 = vsub.f32 %v739, %v1315
  %v1444 = vsub.f32 %v740, %v1316
  %v1445 = vsub.f32 %v741, %v1317
  %v1446 = vsub.f32 %v742, %v1318
  %v1447 = vsub.f32 %v743, %v1319
  %v1448 = vsub.f32 %v744, %v1320
  %v1449 = vsub.f32 %v745, %v1321
  %v1450 = vsub.f32 %v746, %v1322
  %v1451 = vsub.f32 %v747, %v1323
  %v1452 = vsub.f32 %v748, %v1324
  %v1453 = vsub.f32 %v749, %v1325
  %v1454 = vsub.f32 %v750, %v1326
  %v1455 = vsub.f32 %v751, %v1327
  %v1456 = vsub.f32 %v752, %v1328
  %v1457 = vsub.f32 %v753, %v1329
  %v1458 = vsub.f32 %v754, %v1330
  %v1459 = vsub.f32 %v755, %v1331
  %v1460 = vsub.f32 %v756, %v1332
  %v1461 = vsub.f32 %v757, %v1333
  %v1462 = vsub.f32 %v758, %v1334
  %v1463 = vsub.f32 %v759, %v1335
  %v1464 = vsub.f32 %v760, %v1336
  %v1465 = vsub.f32 %v761, %v1337
  %v1466 = vsub.f32 %v762, %v1338
  %v1467 = vsub.f32 %v763, %v1339
  %v1468 = vsub.f32 %v764, %v1340
  %v1469 = vsub.f32 %v765, %v1341
  %v1470 = vsub.f32 %v766, %v1342
  %v1471 = vsub.f32 %v767, %v1343
  %v1472 = vsub.f32 %v768, %v1344
  %v1473 = vsub.f32 %v769, %v1345
  %v1474 = vsub.f32 %v770, %v1346
  %v1475 = vsub.f32 %v771, %v1347
  %v1476 = vsub.f32 %v772, %v1348
  %v1477 = vsub.f32 %v773, %v1349
  %v1478 = vsub.f32 %v774, %v1350
  %v1479 = vsub.f32 %v775, %v1351
  %v1480 = vsub.f32 %v776, %v1352
  %v1481 = vsub.f32 %v777, %v1353
  %v1482 = vsub.f32 %v778, %v1354
  %v1483 = vsub.f32 %v779, %v1355
  %v1484 = vsub.f32 %v780, %v1356
  %v1485 = vsub.f32 %v781, %v1357
  %v1486 = vsub.f32 %v782, %v1358
  %v1487 = vsub.f32 %v783, %v1359
  %v1488 = vsub.f32 %v784, %v1360
  %v1489 = vsub.f32 %v785, %v1361
  %v1490 = vsub.f32 %v786, %v1362
  %v1491 = vsub.f32 %v787, %v1363
  %v1492 = vsub.f32 %v788, %v1364
  %v1493 = vsub.f32 %v789, %v1365
  %v1494 = vsub.f32 %v790, %v1366
  %v1495 = vsub.f32 %v791, %v1367
  %v1496 = vsub.f32 %v792, %v1368
  %v1497 = vsub.f32 %v793, %v1369
  %v1498 = vsub.f32 %v794, %v1370
  %v1499 = vsub.f32 %v795, %v1371
  %v1500 = vsub.f32 %v796, %v1372
  %v1501 = vsub.f32 %v797, %v1373
  %v1502 = vsub.f32 %v798, %v1374
  %v1503 = vsub.f32 %v799, %v1375
  %v1504 = vsub.f32 %v800, %v1376
  %v1505 = vsub.f32 %v801, %v1377
  %v1506 = vsub.f32 %v802, %v1378
  %v1507 = vsub.f32 %v803, %v1379
  %v1508 = vsub.f32 %v804, %v1380
  %v1509 = vsub.f32 %v805, %v1381
  %v1510 = vsub.f32 %v806, %v1382
  %v1511 = vsub.f32 %v807, %v1383
  %v1512 = vsub.f32 %v808, %v1384
  %v1513 = vsub.f32 %v809, %v1385
  %v1514 = vsub.f32 %v810, %v1386
  %v1515 = vsub.f32 %v811, %v1387
  %v1516 = vsub.f32 %v812, %v1388
  %v1517 = vsub.f32 %v813, %v1389
  %v1518 = vsub.f32 %v814, %v1390
  %v1519 = vsub.f32 %v815, %v1391
  %v1520 = vsub.f32 %v816, %v1392
  %v1521 = vsub.f32 %v817, %v1393
  %v1522 = vsub.f32 %v818, %v1394
  %v1523 = vsub.f32 %v819, %v1395
  %v1524 = vsub.f32 %v820, %v1396
  %v1525 = vsub.f32 %v821, %v1397
  %v1526 = vsub.f32 %v822, %v1398
  %v1527 = vsub.f32 %v823, %v1399
  %v1528 = vsub.f32 %v824, %v1400
  %v1529 = vsub.f32 %v825, %v1401
  %v1530 = vsub.f32 %v826, %v1402
  %v1531 = vsub.f32 %v827, %v1403
  %v1532 = vsub.f32 %v828, %v1404
  %v1533 = vsub.f32 %v829, %v1405
  %v1534 = vsub.f32 %v830, %v1406
  %v1535 = vsub.f32 %v831, %v1407
  %v1536 = vsub.f32 %v832, %v1408
  %v1537 = vsub.f32 %v833, %v1409
  %v1538 = vsub.f32 %v834, %v1410
  %v1539 = vsub.f32 %v835, %v1411
  %v1540 = vsub.f32 %v836, %v1412
  %v1541 = vsub.f32 %v837, %v1413
  %v1542 = vsub.f32 %v838, %v1414
  %v1543 = vsub.f32 %v839, %v1415
  %v1544 = vsub.f32 %v840, %v1416
  %v1545 = vsub.f32 %v841, %v1417
  %v1546 = vsub.f32 %v842, %v1418
  %v1547 = vsub.f32 %v843, %v1419
  %v1548 = vsub.f32 %v844, %v1420
  %v1549 = vsub.f32 %v845, %v1421
  %v1550 = vsub.f32 %v846, %v1422
  %v1551 = vsub.f32 %v847, %v1423
  %v1552 = vsub.f32 %v848, %v1424
  %v1553 = vsub.f32 %v849, %v1425
  %v1554 = vsub.f32 %v850, %v1426
  %v1555 = vsub.f32 %v851, %v1427
  %v1556 = vsub.f32 %v852, %v1428
  %v1557 = vsub.f32 %v853, %v1429
  %v1558 = vsub.f32 %v854, %v1430
  %v1559 = vsub.f32 %v855, %v1431
  %v1560 = vsub.f32 %v856, %v1432
  %v1561 = vld [vmem:[%s3] sm:$0xff]
  %v1562 = vld [vmem:[%s3 + $0x8] sm:$0xff]
  %v1563 = vld [vmem:[%s2] sm:$0xff]
  %v1564 = vld [vmem:[%s2 + $0x8] sm:$0xff]
  %v1565 = vld [vmem:[%s2 + $0x10] sm:$0xff]
  %v1566 = vld [vmem:[%s2 + $0x18] sm:$0xff]
  %1567 = vmatprep.subr.mxu0 %v1434
  %1568 = vmatpush1.msra.mxu0 %v1433
  %1569 = vmatprep.subr.mxu0 %v1436
  %1570 = vmatpush1.msra.mxu0 %v1435
  %1571 = vmatprep.subr.mxu0 %v1438
  %1572 = vmatpush1.msra.mxu0 %v1437
  %1573 = vmatprep.subr.mxu0 %v1440
  %1574 = vmatpush1.msra.mxu0 %v1439
  %1575 = vmatprep.subr.mxu0 %v1442
  %1576 = vmatpush1.msra.mxu0 %v1441
  %1577 = vmatprep.subr.mxu0 %v1444
  %1578 = vmatpush1.msra.mxu0 %v1443
  %1579 = vmatprep.subr.mxu0 %v1446
  %1580 = vmatpush1.msra.mxu0 %v1445
  %1581 = vmatprep.subr.mxu0 %v1448
  %1582 = vmatpush1.msra.mxu0 %v1447
  %1583 = vmatprep.subr.mxu0 %v1450
  %1584 = vmatpush1.msra.mxu0 %v1449
  %1585 = vmatprep.subr.mxu0 %v1452
  %1586 = vmatpush1.msra.mxu0 %v1451
  %1587 = vmatprep.subr.mxu0 %v1454
  %1588 = vmatpush1.msra.mxu0 %v1453
  %1589 = vmatprep.subr.mxu0 %v1456
  %1590 = vmatpush1.msra.mxu0 %v1455
  %1591 = vmatprep.subr.mxu0 %v1458
  %1592 = vmatpush1.msra.mxu0 %v1457
  %1593 = vmatprep.subr.mxu0 %v1460
  %1594 = vmatpush1.msra.mxu0 %v1459
  %1595 = vmatprep.subr.mxu0 %v1462
  %1596 = vmatpush1.msra.mxu0 %v1461
  %1597 = vmatprep.subr.mxu0 %v1464
  %1598 = vmatpush1.msra.mxu0 %v1463
  %1599 = vmatprep.subr.mxu0 %v1466
  %1600 = vmatpush1.msra.mxu0 %v1465
  %1601 = vmatprep.subr.mxu0 %v1468
  %1602 = vmatpush1.msra.mxu0 %v1467
  %1603 = vmatprep.subr.mxu0 %v1470
  %1604 = vmatpush1.msra.mxu0 %v1469
  %1605 = vmatprep.subr.mxu0 %v1472
  %1606 = vmatpush1.msra.mxu0 %v1471
  %1607 = vmatprep.subr.mxu0 %v1474
  %1608 = vmatpush1.msra.mxu0 %v1473
  %1609 = vmatprep.subr.mxu0 %v1476
  %1610 = vmatpush1.msra.mxu0 %v1475
  %1611 = vmatprep.subr.mxu0 %v1478
  %1612 = vmatpush1.msra.mxu0 %v1477
  %1613 = vmatprep.subr.mxu0 %v1480
  %1614 = vmatpush1.msra.mxu0 %v1479
  %1615 = vmatprep.subr.mxu0 %v1482
  %1616 = vmatpush1.msra.mxu0 %v1481
  %1617 = vmatprep.subr.mxu0 %v1484
  %1618 = vmatpush1.msra.mxu0 %v1483
  %1619 = vmatprep.subr.mxu0 %v1486
  %1620 = vmatpush1.msra.mxu0 %v1485
  %1621 = vmatprep.subr.mxu0 %v1488
  %1622 = vmatpush1.msra.mxu0 %v1487
  %1623 = vmatprep.subr.mxu0 %v1490
  %1624 = vmatpush1.msra.mxu0 %v1489
  %1625 = vmatprep.subr.mxu0 %v1492
  %1626 = vmatpush1.msra.mxu0 %v1491
  %1627 = vmatprep.subr.mxu0 %v1494
  %1628 = vmatpush1.msra.mxu0 %v1493
  %1629 = vmatprep.subr.mxu0 %v1496
  %1630 = vmatpush1.msra.mxu0 %v1495
  %1631 = vmatprep.mubr.f32.mxu0 %v1564
  %1632 = vmatmul.mubr.f32.gmra.mrb[0].mxu0 %v1563
  %v1633 = vpop.f32.mrb[0].mxu0
  %v1634 = vadd.f32 0.0, %v1633
  %v1635 = vpop.f32.mrb[0].mxu0
  %v1636 = vadd.f32 0.0, %v1635
  %1637 = vdwg.mxu0
  %1638 = vmatprep.subr.mxu0 %v1498
  %1639 = vmatpush1.msra.mxu0 %v1497
  %1640 = vmatprep.subr.mxu0 %v1500
  %1641 = vmatpush1.msra.mxu0 %v1499
  %1642 = vmatprep.subr.mxu0 %v1502
  %1643 = vmatpush1.msra.mxu0 %v1501
  %1644 = vmatprep.subr.mxu0 %v1504
  %1645 = vmatpush1.msra.mxu0 %v1503
  %1646 = vmatprep.subr.mxu0 %v1506
  %1647 = vmatpush1.msra.mxu0 %v1505
  %1648 = vmatprep.subr.mxu0 %v1508
  %1649 = vmatpush1.msra.mxu0 %v1507
  %1650 = vmatprep.subr.mxu0 %v1510
  %1651 = vmatpush1.msra.mxu0 %v1509
  %1652 = vmatprep.subr.mxu0 %v1512
  %1653 = vmatpush1.msra.mxu0 %v1511
  %1654 = vmatprep.subr.mxu0 %v1514
  %1655 = vmatpush1.msra.mxu0 %v1513
  %1656 = vmatprep.subr.mxu0 %v1516
  %1657 = vmatpush1.msra.mxu0 %v1515
  %1658 = vmatprep.subr.mxu0 %v1518
  %1659 = vmatpush1.msra.mxu0 %v1517
  %1660 = vmatprep.subr.mxu0 %v1520
  %1661 = vmatpush1.msra.mxu0 %v1519
  %1662 = vmatprep.subr.mxu0 %v1522
  %1663 = vmatpush1.msra.mxu0 %v1521
  %1664 = vmatprep.subr.mxu0 %v1524
  %1665 = vmatpush1.msra.mxu0 %v1523
  %1666 = vmatprep.subr.mxu0 %v1526
  %1667 = vmatpush1.msra.mxu0 %v1525
  %1668 = vmatprep.subr.mxu0 %v1528
  %1669 = vmatpush1.msra.mxu0 %v1527
  %1670 = vmatprep.subr.mxu0 %v1530
  %1671 = vmatpush1.msra.mxu0 %v1529
  %1672 = vmatprep.subr.mxu0 %v1532
  %1673 = vmatpush1.msra.mxu0 %v1531
  %1674 = vmatprep.subr.mxu0 %v1534
  %1675 = vmatpush1.msra.mxu0 %v1533
  %1676 = vmatprep.subr.mxu0 %v1536
  %1677 = vmatpush1.msra.mxu0 %v1535
  %1678 = vmatprep.subr.mxu0 %v1538
  %1679 = vmatpush1.msra.mxu0 %v1537
  %1680 = vmatprep.subr.mxu0 %v1540
  %1681 = vmatpush1.msra.mxu0 %v1539
  %1682 = vmatprep.subr.mxu0 %v1542
  %1683 = vmatpush1.msra.mxu0 %v1541
  %1684 = vmatprep.subr.mxu0 %v1544
  %1685 = vmatpush1.msra.mxu0 %v1543
  %1686 = vmatprep.subr.mxu0 %v1546
  %1687 = vmatpush1.msra.mxu0 %v1545
  %1688 = vmatprep.subr.mxu0 %v1548
  %1689 = vmatpush1.msra.mxu0 %v1547
  %1690 = vmatprep.subr.mxu0 %v1550
  %1691 = vmatpush1.msra.mxu0 %v1549
  %1692 = vmatprep.subr.mxu0 %v1552
  %1693 = vmatpush1.msra.mxu0 %v1551
  %1694 = vmatprep.subr.mxu0 %v1554
  %1695 = vmatpush1.msra.mxu0 %v1553
  %1696 = vmatprep.subr.mxu0 %v1556
  %1697 = vmatpush1.msra.mxu0 %v1555
  %1698 = vmatprep.subr.mxu0 %v1558
  %1699 = vmatpush1.msra.mxu0 %v1557
  %1700 = vmatprep.subr.mxu0 %v1560
  %1701 = vmatpush1.msra.mxu0 %v1559
  %1702 = vmatprep.mubr.f32.mxu0 %v1566
  %1703 = vmatmul.mubr.f32.gmra.mrb[0].mxu0 %v1565
  %v1704 = vpop.f32.mrb[0].mxu0
  %v1705 = vadd.f32 %v1634, %v1704
  %v1706 = vpop.f32.mrb[0].mxu0
  %v1707 = vadd.f32 %v1636, %v1706
  %1708 = vdwg.mxu0
  %v1709 = vadd.f32 %v1561, %v1705
  %v1710 = vadd.f32 %v1562, %v1707
  %1711 = vst [vmem:[%s3] sm:$0xff] %v1709
  %1712 = vst [vmem:[%s3 + $0x8] sm:$0xff] %v1710
  // Predicated region
  $region18: #{force_output_from_edge.1} parent=0 // pred_check
    _
  $region19: #{force_output_from_edge.1} parent=0 // pred_check_branch
    %1714 = sbr.rel (0) target = $region21
  $region20: #{force_output_from_edge.1} parent=0 // pred_region
    _
  $region21: #{force_output_from_edge.1} parent=0 // pred_fallthru
    _
  // Predicated region
  $region22: #{force_output_from_edge.1} parent=0 // pred_check
    _
  $region23: #{force_output_from_edge.1} parent=0 // pred_check_branch
    %1716 = sbr.rel (0) target = $region25
  $region24: #{force_output_from_edge.1} parent=0 // pred_region
    _
  $region25: #{force_output_from_edge.1} parent=0 // pred_fallthru
    _

</llo_original>
